<compile_context>
chip_gen: v6e
topology: v6e:2x2x1
jax: 0.10.0
libtpu: 0.0.40
codegen_flags: <defaults>
</compile_context>

<pallas_src>
import functools

import jax
import jax.numpy as jnp
from jax.experimental import pallas as pl
from jax.experimental.pallas import tpu as pltpu


def encoder_layer_kernel(x_ref, w_attn_ref, w1_ref, w2_ref, slab_ref, o_ref,
                         *, matmul_dtype):
    """One post-norm TransformerEncoderLayer applied to a (tn, E) row tile."""
    eps = 1e-5  # PyTorch layer_norm_eps default
    E = x_ref.shape[-1]
    FF = w1_ref.shape[-1]

    x = x_ref[...]

    # Packed bias / LayerNorm slab: read once, split with static slices.
    slab = slab_ref[...]
    b_attn = slab[0:1, :E]
    b1     = slab[1:2, :FF]
    b2     = slab[2:3, :E]
    g1     = slab[3:4, :E]
    beta1  = slab[4:5, :E]
    g2     = slab[5:6, :E]
    beta2  = slab[6:7, :E]

    # --- multi-head self attention (seq_len == 1 -> out_proj(value_proj(x))) --
    # TODO(synk): nn.Dropout / attention dropout are stochastic in train mode;
    # implemented as identity (eval-mode semantics).
    attn = jnp.dot(x.astype(matmul_dtype), w_attn_ref[...],
                   preferred_element_type=jnp.float32) + b_attn
    h = x + attn

    # LayerNorm 1 (post-norm); centered value hoisted and reused.
    mu = jnp.mean(h, axis=-1, keepdims=True)
    hc = h - mu
    var = jnp.mean(hc * hc, axis=-1, keepdims=True)
    h = hc * jax.lax.rsqrt(var + eps) * g1 + beta1

    # --- feed-forward: linear1 -> ReLU -> linear2 -----------------------------
    ff = jnp.dot(h.astype(matmul_dtype), w1_ref[...],
                 preferred_element_type=jnp.float32) + b1
    ff = jnp.maximum(ff, 0.0)
    ff = jnp.dot(ff.astype(matmul_dtype), w2_ref[...],
                 preferred_element_type=jnp.float32) + b2
    y = h + ff

    # LayerNorm 2
    mu2 = jnp.mean(y, axis=-1, keepdims=True)
    yc = y - mu2
    var2 = jnp.mean(yc * yc, axis=-1, keepdims=True)
    # NOTE: E=32 < 128 lanes -> masked partial stores; fine at this size.
    o_ref[...] = yc * jax.lax.rsqrt(var2 + eps) * g2 + beta2


def _round_up(a, b):
    return (a + b - 1) // b * b


def _tpu_info():
    try:
        return pltpu.get_tpu_info()
    except Exception:
        return None


def _num_tensorcores():
    """Best-effort TensorCores-per-chip query (v7x / megacore => 2)."""
    info = _tpu_info()
    if info is not None:
        for name in ("tensorcores_per_chip", "num_tensorcores", "cores_per_chip"):
            v = getattr(info, name, None)
            if isinstance(v, int) and 1 <= v <= 4:
                return v
    try:
        kind = jax.devices()[0].device_kind.lower()
        if any(t in kind for t in ("v7", "v5p", "v4")):
            return 2
    except Exception:
        pass
    return 1


def _vmem_budget_bytes():
    info = _tpu_info()
    cap = getattr(info, "vmem_capacity_bytes", None) if info is not None else None
    if isinstance(cap, int) and cap > 0:
        return min(cap // 4, 32 << 20)   # stay well inside scoped defaults
    return 16 << 20                      # conservative v5e scoped default


def _tile_vmem_bytes(tn, E, FF, slab_w):
    io = 2 * 2 * tn * E * 4              # x + out tiles, double-buffered
    inter = tn * FF * 4                  # ReLU intermediate
    weights = (E * E + 2 * E * FF) * 4   # single-buffered grid-invariants
    slab = 8 * slab_w * 4
    return io + inter + weights + slab


def extra_encoder_forward(x, params, *, tile_n=512, matmul_dtype=jnp.float32,
                          single_buffer_weights=True):
    """Pallas forward of extraEncoder. x: (N, E) float32 -> (N, E) float32."""
    N, E = x.shape
    FF = params["w1"].shape[0]

    # --- one-time offline weight fusion / pre-transpose (plain XLA ops) ------
    # attn = x @ wv.T @ wo.T + bv @ wo.T + bo = x @ (wo @ wv).T + b_attn
    w_attn = (params["wo"] @ params["wv"]).T.astype(matmul_dtype)      # (E, E)
    b_attn = params["bv"] @ params["wo"].T + params["bo"]              # (1, E)
    w1_t = params["w1"].T.astype(matmul_dtype)                         # (E, FF)
    w2_t = params["w2"].T.astype(matmul_dtype)                         # (FF, E)

    # Pack the seven small vectors into one (8, W) slab: single DMA + tile.
    slab_w = _round_up(max(E, FF), 128)
    slab = jnp.zeros((8, slab_w), jnp.float32)
    slab = slab.at[0, :E].set(b_attn[0])
    slab = slab.at[1, :FF].set(params["b1"][0])
    slab = slab.at[2, :E].set(params["b2"][0])
    slab = slab.at[3, :E].set(params["g1"][0])
    slab = slab.at[4, :E].set(params["beta1"][0])
    slab = slab.at[5, :E].set(params["g2"][0])
    slab = slab.at[6, :E].set(params["beta2"][0])

    # --- row-tile selection (chip-aware) --------------------------------------
    ncores = _num_tensorcores()
    tn = min(tile_n, _round_up(N, 8))
    if ncores > 1:
        # Give every TensorCore at least one grid step ("parallel" axis shards).
        tn = min(tn, _round_up(pl.cdiv(N, ncores), 8))
    budget = _vmem_budget_bytes()
    while tn > 8 and _tile_vmem_bytes(tn, E, FF, slab_w) > budget:
        tn = _round_up(tn // 2, 8)
    grid_n = pl.cdiv(N, tn)

    vmem_limit = int(min(max(2 * _tile_vmem_bytes(tn, E, FF, slab_w), 4 << 20),
                         32 << 20))

    cost = pl.CostEstimate(
        flops=2 * N * (E * E + 2 * E * FF),
        transcendentals=0,
        bytes_accessed=(2 * N * E + E * E + 2 * E * FF + 8 * slab_w) * 4,
    )

    # Grid-invariant operands: constant index_map -> single-buffer them.
    inv_mode = pl.Buffered(1) if single_buffer_weights else None

    def invariant(shape):
        return pl.BlockSpec(shape, lambda i: (0,) * len(shape),
                            pipeline_mode=inv_mode)

    return pl.pallas_call(
        functools.partial(encoder_layer_kernel, matmul_dtype=matmul_dtype),
        out_shape=jax.ShapeDtypeStruct((N, E), jnp.float32),
        grid_spec=pltpu.PrefetchScalarGridSpec(
            num_scalar_prefetch=0,
            grid=(grid_n,),
            in_specs=[
                pl.BlockSpec((tn, E), lambda i: (i, 0)),   # x row tile
                invariant((E, E)),                         # fused attn projection
                invariant((E, FF)),                        # linear1 (pre-transposed)
                invariant((FF, E)),                        # linear2 (pre-transposed)
                invariant((8, slab_w)),                    # packed bias / LN slab
            ],
            out_specs=pl.BlockSpec((tn, E), lambda i: (i, 0)),
        ),
        compiler_params=pltpu.CompilerParams(
            dimension_semantics=("parallel",),
            vmem_limit_bytes=vmem_limit,
        ),
        cost_estimate=cost,
    )(x, w_attn, w1_t, w2_t, slab)


def reference_forward(x, p):
    """Pure-JAX reference of the same math (eval-mode PyTorch encoder layer)."""
    eps = 1e-5
    v = x @ p["wv"].T + p["bv"]
    attn = v @ p["wo"].T + p["bo"]
    h = x + attn
    mu = h.mean(-1, keepdims=True)
    var = ((h - mu) ** 2).mean(-1, keepdims=True)
    h = (h - mu) / jnp.sqrt(var + eps) * p["g1"] + p["beta1"]
    ff = jnp.maximum(h @ p["w1"].T + p["b1"], 0.0) @ p["w2"].T + p["b2"]
    y = h + ff
    mu2 = y.mean(-1, keepdims=True)
    var2 = ((y - mu2) ** 2).mean(-1, keepdims=True)
    return (y - mu2) / jnp.sqrt(var2 + eps) * p["g2"] + p["beta2"]


if __name__ == "__main__":
    # extraEncoder(input_size=32, heads=4, dropout=0.1, forward_expansion=4)
    N, E, expansion = 96, 32, 4
    FF = E * expansion

    key = jax.random.PRNGKey(0)
    ks = jax.random.split(key, 10)
    s = 0.05
    params = {
        "wv": jax.random.normal(ks[0], (E, E), jnp.float32) * s,
        "bv": jax.random.normal(ks[1], (1, E), jnp.float32) * s,
        "wo": jax.random.normal(ks[2], (E, E), jnp.float32) * s,
        "bo": jax.random.normal(ks[3], (1, E), jnp.float32) * s,
        "w1": jax.random.normal(ks[4], (FF, E), jnp.float32) * s,
        "b1": jax.random.normal(ks[5], (1, FF), jnp.float32) * s,
        "w2": jax.random.normal(ks[6], (E, FF), jnp.float32) * s,
        "b2": jax.random.normal(ks[7], (1, E), jnp.float32) * s,
        # LayerNorm params at PyTorch defaults (gamma=1, beta=0)
        "g1": jnp.ones((1, E), jnp.float32),
        "beta1": jnp.zeros((1, E), jnp.float32),
        "g2": jnp.ones((1, E), jnp.float32),
        "beta2": jnp.zeros((1, E), jnp.float32),
    }

    x = jax.random.normal(ks[8], (N, E), jnp.float32)
    ref = reference_forward(x, params)

    def run(**kw):
        try:
            return jax.block_until_ready(extra_encoder_forward(x, params, **kw))
        except Exception:
            # Fallback if this jax build rejects single-buffered pipeline_mode.
            return jax.block_until_ready(
                extra_encoder_forward(x, params, single_buffer_weights=False, **kw))

    # default path (chip-aware tiling, f32 MXU feeds)
    out = run()
    assert out.shape == (N, E)
    assert jnp.allclose(out, ref, atol=1e-5, rtol=1e-4), "mismatch vs reference"

    # multi-step grid path (exercises tiling / tail blocks / parallel axis)
    out_tiled = run(tile_n=32)
    assert jnp.allclose(out_tiled, ref, atol=1e-5, rtol=1e-4), "tiled mismatch"

    # bf16 MXU-feed path (f32 accumulation) with a correspondingly loose tol
    out_bf16 = run(matmul_dtype=jnp.bfloat16)
    assert jnp.allclose(out_bf16, ref, atol=3e-2, rtol=3e-2), "bf16 mismatch"

    print("KERNEL_OK")
</pallas_src>

<mosaic_0001>
module attributes {stable_mosaic.version = 11 : i64} {
  func.func @encoder_layer_kernel(%arg0: i32, %arg1: memref<96x32xf32, #tpu.memory_space<vmem>>, %arg2: memref<32x32xf32, #tpu.memory_space<vmem>>, %arg3: memref<32x128xf32, #tpu.memory_space<vmem>>, %arg4: memref<128x32xf32, #tpu.memory_space<vmem>>, %arg5: memref<8x128xf32, #tpu.memory_space<vmem>>, %arg6: memref<96x32xf32, #tpu.memory_space<vmem>>) attributes {dimension_semantics = [#tpu.dimension_semantics<parallel>], iteration_bounds = array<i64: 1>, scalar_prefetch = 0 : i64, scratch_operands = 0 : i64, tpu.core_type = #tpu.core_type<tc>, window_params = [{transform_indices = @transform_0, window_bounds = array<i64: 96, 32>}, {pipeline_mode = #tpu.pipeline_mode<synchronous>, transform_indices = @transform_1, window_bounds = array<i64: 32, 32>}, {pipeline_mode = #tpu.pipeline_mode<synchronous>, transform_indices = @transform_2, window_bounds = array<i64: 32, 128>}, {pipeline_mode = #tpu.pipeline_mode<synchronous>, transform_indices = @transform_3, window_bounds = array<i64: 128, 32>}, {pipeline_mode = #tpu.pipeline_mode<synchronous>, transform_indices = @transform_4, window_bounds = array<i64: 8, 128>}, {transform_indices = @transform_5, window_bounds = array<i64: 96, 32>}]} {
    %c0 = arith.constant 0 : index
    %c0_0 = arith.constant 0 : index
    %0 = vector.load %arg1[%c0, %c0_0] : memref<96x32xf32, #tpu.memory_space<vmem>>, vector<96x32xf32>
    %c0_1 = arith.constant 0 : index
    %c0_2 = arith.constant 0 : index
    %1 = vector.load %arg5[%c0_1, %c0_2] : memref<8x128xf32, #tpu.memory_space<vmem>>, vector<8x128xf32>
    %2 = vector.extract_strided_slice %1 {offsets = [0, 0], sizes = [1, 32], strides = [1, 1]} : vector<8x128xf32> to vector<1x32xf32>
    %3 = vector.extract_strided_slice %1 {offsets = [1, 0], sizes = [1, 128], strides = [1, 1]} : vector<8x128xf32> to vector<1x128xf32>
    %4 = vector.extract_strided_slice %1 {offsets = [2, 0], sizes = [1, 32], strides = [1, 1]} : vector<8x128xf32> to vector<1x32xf32>
    %5 = vector.extract_strided_slice %1 {offsets = [3, 0], sizes = [1, 32], strides = [1, 1]} : vector<8x128xf32> to vector<1x32xf32>
    %6 = vector.extract_strided_slice %1 {offsets = [4, 0], sizes = [1, 32], strides = [1, 1]} : vector<8x128xf32> to vector<1x32xf32>
    %7 = vector.extract_strided_slice %1 {offsets = [5, 0], sizes = [1, 32], strides = [1, 1]} : vector<8x128xf32> to vector<1x32xf32>
    %8 = vector.extract_strided_slice %1 {offsets = [6, 0], sizes = [1, 32], strides = [1, 1]} : vector<8x128xf32> to vector<1x32xf32>
    %c0_3 = arith.constant 0 : index
    %c0_4 = arith.constant 0 : index
    %9 = vector.load %arg2[%c0_3, %c0_4] : memref<32x32xf32, #tpu.memory_space<vmem>>, vector<32x32xf32>
    %cst = arith.constant dense<0.000000e+00> : vector<96x32xf32>
    %10 = tpu.matmul %0, %9, %cst {dimension_numbers = #tpu.dot_dimension_numbers<[1], [0], [0], [1], [0, 0, 1, 1], [], []>} : vector<96x32xf32>, vector<32x32xf32>, vector<96x32xf32> -> vector<96x32xf32>
    %11 = vector.broadcast %2 : vector<1x32xf32> to vector<96x32xf32>
    %12 = arith.addf %10, %11 : vector<96x32xf32>
    %13 = arith.addf %0, %12 : vector<96x32xf32>
    %cst_5 = arith.constant dense<0.000000e+00> : vector<96xf32>
    %14 = vector.multi_reduction <add>, %13, %cst_5 [1] : vector<96x32xf32> to vector<96xf32>
    %15 = vector.shape_cast %14 : vector<96xf32> to vector<96x1xf32>
    %cst_6 = arith.constant 3.200000e+01 : f32
    %16 = vector.broadcast %cst_6 : f32 to vector<96x1xf32>
    %17 = arith.divf %15, %16 : vector<96x1xf32>
    %18 = vector.broadcast %17 : vector<96x1xf32> to vector<96x32xf32>
    %19 = arith.subf %13, %18 : vector<96x32xf32>
    %20 = arith.mulf %19, %19 : vector<96x32xf32>
    %cst_7 = arith.constant dense<0.000000e+00> : vector<96xf32>
    %21 = vector.multi_reduction <add>, %20, %cst_7 [1] : vector<96x32xf32> to vector<96xf32>
    %22 = vector.shape_cast %21 : vector<96xf32> to vector<96x1xf32>
    %cst_8 = arith.constant 3.200000e+01 : f32
    %23 = vector.broadcast %cst_8 : f32 to vector<96x1xf32>
    %24 = arith.divf %22, %23 : vector<96x1xf32>
    %cst_9 = arith.constant 9.99999974E-6 : f32
    %25 = vector.broadcast %cst_9 : f32 to vector<96x1xf32>
    %26 = arith.addf %24, %25 : vector<96x1xf32>
    %27 = math.rsqrt %26 : vector<96x1xf32>
    %28 = vector.broadcast %27 : vector<96x1xf32> to vector<96x32xf32>
    %29 = arith.mulf %19, %28 : vector<96x32xf32>
    %30 = vector.broadcast %5 : vector<1x32xf32> to vector<96x32xf32>
    %31 = arith.mulf %29, %30 : vector<96x32xf32>
    %32 = vector.broadcast %6 : vector<1x32xf32> to vector<96x32xf32>
    %33 = arith.addf %31, %32 : vector<96x32xf32>
    %c0_10 = arith.constant 0 : index
    %c0_11 = arith.constant 0 : index
    %34 = vector.load %arg3[%c0_10, %c0_11] : memref<32x128xf32, #tpu.memory_space<vmem>>, vector<32x128xf32>
    %cst_12 = arith.constant dense<0.000000e+00> : vector<96x128xf32>
    %35 = tpu.matmul %33, %34, %cst_12 {dimension_numbers = #tpu.dot_dimension_numbers<[1], [0], [0], [1], [0, 0, 1, 1], [], []>} : vector<96x32xf32>, vector<32x128xf32>, vector<96x128xf32> -> vector<96x128xf32>
    %36 = vector.broadcast %3 : vector<1x128xf32> to vector<96x128xf32>
    %37 = arith.addf %35, %36 : vector<96x128xf32>
    %cst_13 = arith.constant 0.000000e+00 : f32
    %38 = vector.broadcast %cst_13 : f32 to vector<96x128xf32>
    %39 = arith.maximumf %37, %38 : vector<96x128xf32>
    %c0_14 = arith.constant 0 : index
    %c0_15 = arith.constant 0 : index
    %40 = vector.load %arg4[%c0_14, %c0_15] : memref<128x32xf32, #tpu.memory_space<vmem>>, vector<128x32xf32>
    %cst_16 = arith.constant dense<0.000000e+00> : vector<96x32xf32>
    %41 = tpu.matmul %39, %40, %cst_16 {dimension_numbers = #tpu.dot_dimension_numbers<[1], [0], [0], [1], [0, 0, 1, 1], [], []>} : vector<96x128xf32>, vector<128x32xf32>, vector<96x32xf32> -> vector<96x32xf32>
    %42 = vector.broadcast %4 : vector<1x32xf32> to vector<96x32xf32>
    %43 = arith.addf %41, %42 : vector<96x32xf32>
    %44 = arith.addf %33, %43 : vector<96x32xf32>
    %cst_17 = arith.constant dense<0.000000e+00> : vector<96xf32>
    %45 = vector.multi_reduction <add>, %44, %cst_17 [1] : vector<96x32xf32> to vector<96xf32>
    %46 = vector.shape_cast %45 : vector<96xf32> to vector<96x1xf32>
    %cst_18 = arith.constant 3.200000e+01 : f32
    %47 = vector.broadcast %cst_18 : f32 to vector<96x1xf32>
    %48 = arith.divf %46, %47 : vector<96x1xf32>
    %49 = vector.broadcast %48 : vector<96x1xf32> to vector<96x32xf32>
    %50 = arith.subf %44, %49 : vector<96x32xf32>
    %51 = arith.mulf %50, %50 : vector<96x32xf32>
    %cst_19 = arith.constant dense<0.000000e+00> : vector<96xf32>
    %52 = vector.multi_reduction <add>, %51, %cst_19 [1] : vector<96x32xf32> to vector<96xf32>
    %53 = vector.shape_cast %52 : vector<96xf32> to vector<96x1xf32>
    %cst_20 = arith.constant 3.200000e+01 : f32
    %54 = vector.broadcast %cst_20 : f32 to vector<96x1xf32>
    %55 = arith.divf %53, %54 : vector<96x1xf32>
    %cst_21 = arith.constant 9.99999974E-6 : f32
    %56 = vector.broadcast %cst_21 : f32 to vector<96x1xf32>
    %57 = arith.addf %55, %56 : vector<96x1xf32>
    %58 = math.rsqrt %57 : vector<96x1xf32>
    %59 = vector.broadcast %58 : vector<96x1xf32> to vector<96x32xf32>
    %60 = arith.mulf %50, %59 : vector<96x32xf32>
    %61 = vector.broadcast %7 : vector<1x32xf32> to vector<96x32xf32>
    %62 = arith.mulf %60, %61 : vector<96x32xf32>
    %63 = vector.broadcast %8 : vector<1x32xf32> to vector<96x32xf32>
    %64 = arith.addf %62, %63 : vector<96x32xf32>
    %c0_22 = arith.constant 0 : index
    %c0_23 = arith.constant 0 : index
    %65 = vector.load %arg6[%c0_22, %c0_23] : memref<96x32xf32, #tpu.memory_space<vmem>>, vector<96x32xf32>
    tpu.vector_store %arg6[%c0_22, %c0_23], %64 {strides = array<i32>} : memref<96x32xf32, #tpu.memory_space<vmem>>, vector<96x32xf32>,
    return
  }
  func.func @transform_0(%arg0: i32) -> (i32, i32) {
    %c0_i32 = arith.constant 0 : i32
    %c0_i32_0 = arith.constant 0 : i32
    return %arg0, %c0_i32 : i32, i32
  }
  func.func @transform_1(%arg0: i32) -> (i32, i32) {
    %c0_i32 = arith.constant 0 : i32
    %c0_i32_0 = arith.constant 0 : i32
    %c0_i32_1 = arith.constant 0 : i32
    return %c0_i32, %c0_i32_0 : i32, i32
  }
  func.func @transform_2(%arg0: i32) -> (i32, i32) {
    %c0_i32 = arith.constant 0 : i32
    %c0_i32_0 = arith.constant 0 : i32
    %c0_i32_1 = arith.constant 0 : i32
    return %c0_i32, %c0_i32_0 : i32, i32
  }
  func.func @transform_3(%arg0: i32) -> (i32, i32) {
    %c0_i32 = arith.constant 0 : i32
    %c0_i32_0 = arith.constant 0 : i32
    %c0_i32_1 = arith.constant 0 : i32
    return %c0_i32, %c0_i32_0 : i32, i32
  }
  func.func @transform_4(%arg0: i32) -> (i32, i32) {
    %c0_i32 = arith.constant 0 : i32
    %c0_i32_0 = arith.constant 0 : i32
    %c0_i32_1 = arith.constant 0 : i32
    return %c0_i32, %c0_i32_0 : i32, i32
  }
  func.func @transform_5(%arg0: i32) -> (i32, i32) {
    %c0_i32 = arith.constant 0 : i32
    %c0_i32_0 = arith.constant 0 : i32
    return %arg0, %c0_i32 : i32, i32
  }
}

module attributes {stable_mosaic.version = 11 : i64} {
  func.func @encoder_layer_kernel(%arg0: i32, %arg1: memref<96x32xf32, #tpu.memory_space<vmem>>, %arg2: memref<32x32xf32, #tpu.memory_space<vmem>>, %arg3: memref<32x128xf32, #tpu.memory_space<vmem>>, %arg4: memref<128x32xf32, #tpu.memory_space<vmem>>, %arg5: memref<8x128xf32, #tpu.memory_space<vmem>>, %arg6: memref<96x32xf32, #tpu.memory_space<vmem>>) attributes {dimension_semantics = [#tpu.dimension_semantics<parallel>], iteration_bounds = array<i64: 1>, scalar_prefetch = 0 : i64, scratch_operands = 0 : i64, tpu.core_type = #tpu.core_type<tc>, window_params = [{transform_indices = @transform_0, window_bounds = array<i64: 96, 32>}, {pipeline_mode = #tpu.pipeline_mode<synchronous>, transform_indices = @transform_1, window_bounds = array<i64: 32, 32>}, {pipeline_mode = #tpu.pipeline_mode<synchronous>, transform_indices = @transform_2, window_bounds = array<i64: 32, 128>}, {pipeline_mode = #tpu.pipeline_mode<synchronous>, transform_indices = @transform_3, window_bounds = array<i64: 128, 32>}, {pipeline_mode = #tpu.pipeline_mode<synchronous>, transform_indices = @transform_4, window_bounds = array<i64: 8, 128>}, {transform_indices = @transform_5, window_bounds = array<i64: 96, 32>}]} {
    %c0 = arith.constant 0 : index
    %c0_0 = arith.constant 0 : index
    %0 = vector.load %arg1[%c0, %c0_0] : memref<96x32xf32, #tpu.memory_space<vmem>>, vector<96x32xf32>
    %c0_1 = arith.constant 0 : index
    %c0_2 = arith.constant 0 : index
    %1 = vector.load %arg5[%c0_1, %c0_2] : memref<8x128xf32, #tpu.memory_space<vmem>>, vector<8x128xf32>
    %2 = vector.extract_strided_slice %1 {offsets = [0, 0], sizes = [1, 32], strides = [1, 1]} : vector<8x128xf32> to vector<1x32xf32>
    %3 = vector.extract_strided_slice %1 {offsets = [1, 0], sizes = [1, 128], strides = [1, 1]} : vector<8x128xf32> to vector<1x128xf32>
    %4 = vector.extract_strided_slice %1 {offsets = [2, 0], sizes = [1, 32], strides = [1, 1]} : vector<8x128xf32> to vector<1x32xf32>
    %5 = vector.extract_strided_slice %1 {offsets = [3, 0], sizes = [1, 32], strides = [1, 1]} : vector<8x128xf32> to vector<1x32xf32>
    %6 = vector.extract_strided_slice %1 {offsets = [4, 0], sizes = [1, 32], strides = [1, 1]} : vector<8x128xf32> to vector<1x32xf32>
    %7 = vector.extract_strided_slice %1 {offsets = [5, 0], sizes = [1, 32], strides = [1, 1]} : vector<8x128xf32> to vector<1x32xf32>
    %8 = vector.extract_strided_slice %1 {offsets = [6, 0], sizes = [1, 32], strides = [1, 1]} : vector<8x128xf32> to vector<1x32xf32>
    %c0_3 = arith.constant 0 : index
    %c0_4 = arith.constant 0 : index
    %9 = vector.load %arg2[%c0_3, %c0_4] : memref<32x32xf32, #tpu.memory_space<vmem>>, vector<32x32xf32>
    %cst = arith.constant dense<0.000000e+00> : vector<96x32xf32>
    %10 = tpu.matmul %0, %9, %cst {dimension_numbers = #tpu.dot_dimension_numbers<[1], [0], [0], [1], [0, 0, 1, 1], [], []>} : vector<96x32xf32>, vector<32x32xf32>, vector<96x32xf32> -> vector<96x32xf32>
    %11 = vector.broadcast %2 : vector<1x32xf32> to vector<96x32xf32>
    %12 = arith.addf %10, %11 : vector<96x32xf32>
    %13 = arith.addf %0, %12 : vector<96x32xf32>
    %cst_5 = arith.constant dense<0.000000e+00> : vector<96xf32>
    %14 = vector.multi_reduction <add>, %13, %cst_5 [1] : vector<96x32xf32> to vector<96xf32>
    %15 = vector.shape_cast %14 : vector<96xf32> to vector<96x1xf32>
    %cst_6 = arith.constant 3.200000e+01 : f32
    %16 = vector.broadcast %cst_6 : f32 to vector<96x1xf32>
    %17 = arith.divf %15, %16 : vector<96x1xf32>
    %18 = vector.broadcast %17 : vector<96x1xf32> to vector<96x32xf32>
    %19 = arith.subf %13, %18 : vector<96x32xf32>
    %20 = arith.mulf %19, %19 : vector<96x32xf32>
    %cst_7 = arith.constant dense<0.000000e+00> : vector<96xf32>
    %21 = vector.multi_reduction <add>, %20, %cst_7 [1] : vector<96x32xf32> to vector<96xf32>
    %22 = vector.shape_cast %21 : vector<96xf32> to vector<96x1xf32>
    %cst_8 = arith.constant 3.200000e+01 : f32
    %23 = vector.broadcast %cst_8 : f32 to vector<96x1xf32>
    %24 = arith.divf %22, %23 : vector<96x1xf32>
    %cst_9 = arith.constant 9.99999974E-6 : f32
    %25 = vector.broadcast %cst_9 : f32 to vector<96x1xf32>
    %26 = arith.addf %24, %25 : vector<96x1xf32>
    %27 = math.rsqrt %26 : vector<96x1xf32>
    %28 = vector.broadcast %27 : vector<96x1xf32> to vector<96x32xf32>
    %29 = arith.mulf %19, %28 : vector<96x32xf32>
    %30 = vector.broadcast %5 : vector<1x32xf32> to vector<96x32xf32>
    %31 = arith.mulf %29, %30 : vector<96x32xf32>
    %32 = vector.broadcast %6 : vector<1x32xf32> to vector<96x32xf32>
    %33 = arith.addf %31, %32 : vector<96x32xf32>
    %c0_10 = arith.constant 0 : index
    %c0_11 = arith.constant 0 : index
    %34 = vector.load %arg3[%c0_10, %c0_11] : memref<32x128xf32, #tpu.memory_space<vmem>>, vector<32x128xf32>
    %cst_12 = arith.constant dense<0.000000e+00> : vector<96x128xf32>
    %35 = tpu.matmul %33, %34, %cst_12 {dimension_numbers = #tpu.dot_dimension_numbers<[1], [0], [0], [1], [0, 0, 1, 1], [], []>} : vector<96x32xf32>, vector<32x128xf32>, vector<96x128xf32> -> vector<96x128xf32>
    %36 = vector.broadcast %3 : vector<1x128xf32> to vector<96x128xf32>
    %37 = arith.addf %35, %36 : vector<96x128xf32>
    %cst_13 = arith.constant 0.000000e+00 : f32
    %38 = vector.broadcast %cst_13 : f32 to vector<96x128xf32>
    %39 = arith.maximumf %37, %38 : vector<96x128xf32>
    %c0_14 = arith.constant 0 : index
    %c0_15 = arith.constant 0 : index
    %40 = vector.load %arg4[%c0_14, %c0_15] : memref<128x32xf32, #tpu.memory_space<vmem>>, vector<128x32xf32>
    %cst_16 = arith.constant dense<0.000000e+00> : vector<96x32xf32>
    %41 = tpu.matmul %39, %40, %cst_16 {dimension_numbers = #tpu.dot_dimension_numbers<[1], [0], [0], [1], [0, 0, 1, 1], [], []>} : vector<96x128xf32>, vector<128x32xf32>, vector<96x32xf32> -> vector<96x32xf32>
    %42 = vector.broadcast %4 : vector<1x32xf32> to vector<96x32xf32>
    %43 = arith.addf %41, %42 : vector<96x32xf32>
    %44 = arith.addf %33, %43 : vector<96x32xf32>
    %cst_17 = arith.constant dense<0.000000e+00> : vector<96xf32>
    %45 = vector.multi_reduction <add>, %44, %cst_17 [1] : vector<96x32xf32> to vector<96xf32>
    %46 = vector.shape_cast %45 : vector<96xf32> to vector<96x1xf32>
    %cst_18 = arith.constant 3.200000e+01 : f32
    %47 = vector.broadcast %cst_18 : f32 to vector<96x1xf32>
    %48 = arith.divf %46, %47 : vector<96x1xf32>
    %49 = vector.broadcast %48 : vector<96x1xf32> to vector<96x32xf32>
    %50 = arith.subf %44, %49 : vector<96x32xf32>
    %51 = arith.mulf %50, %50 : vector<96x32xf32>
    %cst_19 = arith.constant dense<0.000000e+00> : vector<96xf32>
    %52 = vector.multi_reduction <add>, %51, %cst_19 [1] : vector<96x32xf32> to vector<96xf32>
    %53 = vector.shape_cast %52 : vector<96xf32> to vector<96x1xf32>
    %cst_20 = arith.constant 3.200000e+01 : f32
    %54 = vector.broadcast %cst_20 : f32 to vector<96x1xf32>
    %55 = arith.divf %53, %54 : vector<96x1xf32>
    %cst_21 = arith.constant 9.99999974E-6 : f32
    %56 = vector.broadcast %cst_21 : f32 to vector<96x1xf32>
    %57 = arith.addf %55, %56 : vector<96x1xf32>
    %58 = math.rsqrt %57 : vector<96x1xf32>
    %59 = vector.broadcast %58 : vector<96x1xf32> to vector<96x32xf32>
    %60 = arith.mulf %50, %59 : vector<96x32xf32>
    %61 = vector.broadcast %7 : vector<1x32xf32> to vector<96x32xf32>
    %62 = arith.mulf %60, %61 : vector<96x32xf32>
    %63 = vector.broadcast %8 : vector<1x32xf32> to vector<96x32xf32>
    %64 = arith.addf %62, %63 : vector<96x32xf32>
    %c0_22 = arith.constant 0 : index
    %c0_23 = arith.constant 0 : index
    %65 = vector.load %arg6[%c0_22, %c0_23] : memref<96x32xf32, #tpu.memory_space<vmem>>, vector<96x32xf32>
    tpu.vector_store %arg6[%c0_22, %c0_23], %64 {strides = array<i32>} : memref<96x32xf32, #tpu.memory_space<vmem>>, vector<96x32xf32>,
    return
  }
  func.func @transform_0(%arg0: i32) -> (i32, i32) {
    %c0_i32 = arith.constant 0 : i32
    %c0_i32_0 = arith.constant 0 : i32
    return %arg0, %c0_i32 : i32, i32
  }
  func.func @transform_1(%arg0: i32) -> (i32, i32) {
    %c0_i32 = arith.constant 0 : i32
    %c0_i32_0 = arith.constant 0 : i32
    %c0_i32_1 = arith.constant 0 : i32
    return %c0_i32, %c0_i32_0 : i32, i32
  }
  func.func @transform_2(%arg0: i32) -> (i32, i32) {
    %c0_i32 = arith.constant 0 : i32
    %c0_i32_0 = arith.constant 0 : i32
    %c0_i32_1 = arith.constant 0 : i32
    return %c0_i32, %c0_i32_0 : i32, i32
  }
  func.func @transform_3(%arg0: i32) -> (i32, i32) {
    %c0_i32 = arith.constant 0 : i32
    %c0_i32_0 = arith.constant 0 : i32
    %c0_i32_1 = arith.constant 0 : i32
    return %c0_i32, %c0_i32_0 : i32, i32
  }
  func.func @transform_4(%arg0: i32) -> (i32, i32) {
    %c0_i32 = arith.constant 0 : i32
    %c0_i32_0 = arith.constant 0 : i32
    %c0_i32_1 = arith.constant 0 : i32
    return %c0_i32, %c0_i32_0 : i32, i32
  }
  func.func @transform_5(%arg0: i32) -> (i32, i32) {
    %c0_i32 = arith.constant 0 : i32
    %c0_i32_0 = arith.constant 0 : i32
    return %arg0, %c0_i32 : i32, i32
  }
}

</mosaic_0001>

<llo_original>
// kernel: tpu_custom_call.1
$region0: #{tpu_custom_call.1}
  #allocation0 [shape = 'u32[]', space=smem, size = 0x4, offset = 0x4, fixed_abs, tag = 'smem constant byte address 0x4 - core index']
  #allocation1 [shape = 'u32[144,128]{1,0:T(1,128)}', space=vmem, size = 0x12000, scoped, tag = 'internal scratch']
  %s0 = inlined_call_operand.vmem [shape: f32[96,32], index: 0, kind: input, shape index: {}]
  %s1 = inlined_call_operand.vmem [shape: f32[32,32], index: 1, kind: input, shape index: {}]
  %s2 = inlined_call_operand.vmem [shape: f32[32,128], index: 2, kind: input, shape index: {}]
  %s3 = inlined_call_operand.vmem [shape: f32[128,32], index: 3, kind: input, shape index: {}]
  %s4 = inlined_call_operand.vmem [shape: f32[8,128], index: 4, kind: input, shape index: {}]
  %s5 = inlined_call_operand.vmem [shape: f32[96,32], index: 5, kind: output, shape index: {}]
  %s6 = sld [smem:[#allocation0]]
  $region30: #{tpu_custom_call.1} parent=0
    _
  %s8 = ssub.s32 1, %s6
  %s9 = scalar_select 0, %s8, %s6
  // Predicated region
  $region2: #{tpu_custom_call.1} parent=0 // pred_check
    _
  $region3: #{tpu_custom_call.1} parent=0 // pred_check_branch
    %11 = sbr.rel (0) target = $region5
  $region4: #{tpu_custom_call.1} parent=0 // pred_region
    _
  $region5: #{tpu_custom_call.1} parent=0 // pred_fallthru
    _
  // Predicated region
  $region6: #{tpu_custom_call.1} parent=0 // pred_check
    _
  $region7: #{tpu_custom_call.1} parent=0 // pred_check_branch
    %13 = sbr.rel (0) target = $region9
  $region8: #{tpu_custom_call.1} parent=0 // pred_region
    _
  $region9: #{tpu_custom_call.1} parent=0 // pred_fallthru
    _
  // Predicated region
  $region10: #{tpu_custom_call.1} parent=0 // pred_check
    _
  $region11: #{tpu_custom_call.1} parent=0 // pred_check_branch
    %15 = sbr.rel (0) target = $region13
  $region12: #{tpu_custom_call.1} parent=0 // pred_region
    _
  $region13: #{tpu_custom_call.1} parent=0 // pred_fallthru
    _
  // Predicated region
  $region14: #{tpu_custom_call.1} parent=0 // pred_check
    _
  $region15: #{tpu_custom_call.1} parent=0 // pred_check_branch
    %17 = sbr.rel (0) target = $region17
  $region16: #{tpu_custom_call.1} parent=0 // pred_region
    _
  $region17: #{tpu_custom_call.1} parent=0 // pred_fallthru
    _
  // Predicated region
  $region18: #{tpu_custom_call.1} parent=0 // pred_check
    _
  $region19: #{tpu_custom_call.1} parent=0 // pred_check_branch
    %19 = sbr.rel (0) target = $region21
  $region20: #{tpu_custom_call.1} parent=0 // pred_region
    _
  $region21: #{tpu_custom_call.1} parent=0 // pred_fallthru
    _
  %v20 = vld [vmem:[%s0] sm:$0xff]
  %v21 = vld [vmem:[%s0 + $0x8] sm:$0xff]
  %v22 = vld [vmem:[%s0 + $0x10] sm:$0xff]
  %v23 = vld [vmem:[%s0 + $0x18] sm:$0xff]
  %v24 = vld [vmem:[%s0 + $0x20] sm:$0xff]
  %v25 = vld [vmem:[%s0 + $0x28] sm:$0xff]
  %v26 = vld [vmem:[%s0 + $0x30] sm:$0xff]
  %v27 = vld [vmem:[%s0 + $0x38] sm:$0xff]
  %v28 = vld [vmem:[%s0 + $0x40] sm:$0xff]
  %v29 = vld [vmem:[%s0 + $0x48] sm:$0xff]
  %v30 = vld [vmem:[%s0 + $0x50] sm:$0xff]
  %v31 = vld [vmem:[%s0 + $0x58] sm:$0xff]
  %v32 = vld [vmem:[%s4] sm:$0xff]
  %v33 = vld [vmem:[%s1] sm:$0xff]
  %v34 = vld [vmem:[%s1 + $0x8] sm:$0xff]
  %v35 = vld [vmem:[%s1 + $0x10] sm:$0xff]
  %v36 = vld [vmem:[%s1 + $0x18] sm:$0xff]
  %v37 = vlaneseq
  %v38 = vshrl.u32 %v37, 7
  %v39 = vsub.s32 0, %v38
  %v40 = vrot.slane %v32, %v39
  %vm41 = vcmask 261120
  %v43 = vsel %vm41, %v20, 0
  %v46 = vsel %vm41, %v21, 0
  %v49 = vsel %vm41, %v22, 0
  %v52 = vsel %vm41, %v23, 0
  %v55 = vsel %vm41, %v24, 0
  %v58 = vsel %vm41, %v25, 0
  %v61 = vsel %vm41, %v26, 0
  %v64 = vsel %vm41, %v27, 0
  %v67 = vsel %vm41, %v28, 0
  %v70 = vsel %vm41, %v29, 0
  %v73 = vsel %vm41, %v30, 0
  %v76 = vsel %vm41, %v31, 0
  %78 = vmatprep.subr.mxu0 0.0
  %79 = vmatpush1.msra.mxu0 0.0
  %80 = vmatprep.subr.mxu0 0.0
  %81 = vmatpush1.msra.mxu0 0.0
  %82 = vmatprep.subr.mxu0 0.0
  %83 = vmatpush1.msra.mxu0 0.0
  %84 = vmatprep.subr.mxu0 0.0
  %85 = vmatpush1.msra.mxu0 0.0
  %86 = vmatprep.subr.mxu0 0.0
  %87 = vmatpush1.msra.mxu0 0.0
  %88 = vmatprep.subr.mxu0 0.0
  %89 = vmatpush1.msra.mxu0 0.0
  %90 = vmatprep.subr.mxu0 0.0
  %91 = vmatpush1.msra.mxu0 0.0
  %92 = vmatprep.subr.mxu0 0.0
  %93 = vmatpush1.msra.mxu0 0.0
  %94 = vmatprep.subr.mxu0 0.0
  %95 = vmatpush1.msra.mxu0 0.0
  %96 = vmatprep.subr.mxu0 0.0
  %97 = vmatpush1.msra.mxu0 0.0
  %98 = vmatprep.subr.mxu0 0.0
  %99 = vmatpush1.msra.mxu0 0.0
  %100 = vmatprep.subr.mxu0 0.0
  %101 = vmatpush1.msra.mxu0 0.0
  %102 = vmatprep.subr.mxu0 0.0
  %103 = vmatpush1.msra.mxu0 %v36
  %104 = vmatprep.subr.mxu0 0.0
  %105 = vmatpush1.msra.mxu0 %v35
  %106 = vmatprep.subr.mxu0 0.0
  %107 = vmatpush1.msra.mxu0 %v34
  %108 = vmatprep.subr.mxu0 0.0
  %109 = vmatpush1.msra.mxu0 %v33
  %110 = vmatprep.subr.mxu0 0.0
  %111 = vmatpush2.msra.mxu0 0.0
  %112 = vmatprep.subr.mxu0 0.0
  %113 = vmatpush2.msra.mxu0 0.0
  %114 = vmatprep.subr.mxu0 0.0
  %115 = vmatpush2.msra.mxu0 0.0
  %116 = vmatprep.subr.mxu0 0.0
  %117 = vmatpush2.msra.mxu0 0.0
  %118 = vmatprep.subr.mxu0 0.0
  %119 = vmatpush2.msra.mxu0 0.0
  %120 = vmatprep.subr.mxu0 0.0
  %121 = vmatpush2.msra.mxu0 0.0
  %122 = vmatprep.subr.mxu0 0.0
  %123 = vmatpush2.msra.mxu0 0.0
  %124 = vmatprep.subr.mxu0 0.0
  %125 = vmatpush2.msra.mxu0 0.0
  %126 = vmatprep.subr.mxu0 0.0
  %127 = vmatpush2.msra.mxu0 0.0
  %128 = vmatprep.subr.mxu0 0.0
  %129 = vmatpush2.msra.mxu0 0.0
  %130 = vmatprep.subr.mxu0 0.0
  %131 = vmatpush2.msra.mxu0 0.0
  %132 = vmatprep.subr.mxu0 0.0
  %133 = vmatpush2.msra.mxu0 0.0
  %134 = vmatprep.subr.mxu0 0.0
  %135 = vmatpush2.msra.mxu0 0.0
  %136 = vmatprep.subr.mxu0 0.0
  %137 = vmatpush2.msra.mxu0 0.0
  %138 = vmatprep.subr.mxu0 0.0
  %139 = vmatpush2.msra.mxu0 0.0
  %140 = vmatprep.subr.mxu0 0.0
  %141 = vmatpush2.msra.mxu0 0.0
  %142 = vmatprep.mubr.f32.mxu0 0.0
  %143 = vmatmul.mubr.f32.gmra.mxu0 %v43
  %v144 = vpop.f32.mrf.mxu0
  %v145 = vadd.f32 %v40, %v144
  %v146 = vpop.f32.mrf.mxu0
  %147 = vmatprep.mubr.f32.mxu0 0.0
  %148 = vmatmul.mubr.f32.gmra.mxu0 %v46
  %v149 = vpop.f32.mrf.mxu0
  %v150 = vadd.f32 %v40, %v149
  %v151 = vpop.f32.mrf.mxu0
  %152 = vmatprep.mubr.f32.mxu0 0.0
  %153 = vmatmul.mubr.f32.gmra.mxu0 %v49
  %v154 = vpop.f32.mrf.mxu0
  %v155 = vadd.f32 %v40, %v154
  %v156 = vpop.f32.mrf.mxu0
  %157 = vmatprep.mubr.f32.mxu0 0.0
  %158 = vmatmul.mubr.f32.gmra.mxu0 %v52
  %v159 = vpop.f32.mrf.mxu0
  %v160 = vadd.f32 %v40, %v159
  %v161 = vpop.f32.mrf.mxu0
  %162 = vmatprep.mubr.f32.mxu0 0.0
  %163 = vmatmul.mubr.f32.gmra.mxu0 %v55
  %v164 = vpop.f32.mrf.mxu0
  %v165 = vadd.f32 %v40, %v164
  %v166 = vpop.f32.mrf.mxu0
  %167 = vmatprep.mubr.f32.mxu0 0.0
  %168 = vmatmul.mubr.f32.gmra.mxu0 %v58
  %v169 = vpop.f32.mrf.mxu0
  %v170 = vadd.f32 %v40, %v169
  %v171 = vpop.f32.mrf.mxu0
  %172 = vmatprep.mubr.f32.mxu0 0.0
  %173 = vmatmul.mubr.f32.gmra.mxu0 %v61
  %v174 = vpop.f32.mrf.mxu0
  %v175 = vadd.f32 %v40, %v174
  %v176 = vpop.f32.mrf.mxu0
  %177 = vmatprep.mubr.f32.mxu0 0.0
  %178 = vmatmul.mubr.f32.gmra.mxu0 %v64
  %v179 = vpop.f32.mrf.mxu0
  %v180 = vadd.f32 %v40, %v179
  %v181 = vpop.f32.mrf.mxu0
  %182 = vmatprep.mubr.f32.mxu0 0.0
  %183 = vmatmul.mubr.f32.gmra.mxu0 %v67
  %v184 = vpop.f32.mrf.mxu0
  %v185 = vadd.f32 %v40, %v184
  %v186 = vpop.f32.mrf.mxu0
  %187 = vmatprep.mubr.f32.mxu0 0.0
  %188 = vmatmul.mubr.f32.gmra.mxu0 %v70
  %v189 = vpop.f32.mrf.mxu0
  %v190 = vadd.f32 %v40, %v189
  %v191 = vpop.f32.mrf.mxu0
  %192 = vmatprep.mubr.f32.mxu0 0.0
  %193 = vmatmul.mubr.f32.gmra.mxu0 %v73
  %v194 = vpop.f32.mrf.mxu0
  %v195 = vadd.f32 %v40, %v194
  %v196 = vpop.f32.mrf.mxu0
  %197 = vmatprep.mubr.f32.mxu0 0.0
  %198 = vmatmul.mubr.f32.gmra.mxu0 %v76
  %v199 = vpop.f32.mrf.mxu0
  %v200 = vadd.f32 %v40, %v199
  %v201 = vpop.f32.mrf.mxu0
  %202 = vdwg.mxu0
  %v203 = vadd.f32 %v20, %v145
  %v204 = vadd.f32 %v21, %v150
  %v205 = vadd.f32 %v22, %v155
  %v206 = vadd.f32 %v23, %v160
  %v207 = vadd.f32 %v24, %v165
  %v208 = vadd.f32 %v25, %v170
  %v209 = vadd.f32 %v26, %v175
  %v210 = vadd.f32 %v27, %v180
  %v211 = vadd.f32 %v28, %v185
  %v212 = vadd.f32 %v29, %v190
  %v213 = vadd.f32 %v30, %v195
  %v214 = vadd.f32 %v31, %v200
  %v215 = vsel %vm41, %v203, 0.0
  %216 = vadd.xlane.f32.xlu0 %v215
  %v217 = vpop.xlane.xlu0 %216
  %v218 = vsel %vm41, %v204, 0.0
  %219 = vadd.xlane.f32.xlu0 %v218
  %v220 = vpop.xlane.xlu0 %219
  %v221 = vsel %vm41, %v205, 0.0
  %222 = vadd.xlane.f32.xlu0 %v221
  %v223 = vpop.xlane.xlu0 %222
  %v224 = vsel %vm41, %v206, 0.0
  %225 = vadd.xlane.f32.xlu0 %v224
  %v226 = vpop.xlane.xlu0 %225
  %v227 = vsel %vm41, %v207, 0.0
  %228 = vadd.xlane.f32.xlu0 %v227
  %v229 = vpop.xlane.xlu0 %228
  %v230 = vsel %vm41, %v208, 0.0
  %231 = vadd.xlane.f32.xlu0 %v230
  %v232 = vpop.xlane.xlu0 %231
  %v233 = vsel %vm41, %v209, 0.0
  %234 = vadd.xlane.f32.xlu0 %v233
  %v235 = vpop.xlane.xlu0 %234
  %v236 = vsel %vm41, %v210, 0.0
  %237 = vadd.xlane.f32.xlu0 %v236
  %v238 = vpop.xlane.xlu0 %237
  %v239 = vsel %vm41, %v211, 0.0
  %240 = vadd.xlane.f32.xlu0 %v239
  %v241 = vpop.xlane.xlu0 %240
  %v242 = vsel %vm41, %v212, 0.0
  %243 = vadd.xlane.f32.xlu0 %v242
  %v244 = vpop.xlane.xlu0 %243
  %v245 = vsel %vm41, %v213, 0.0
  %246 = vadd.xlane.f32.xlu0 %v245
  %v247 = vpop.xlane.xlu0 %246
  %v248 = vsel %vm41, %v214, 0.0
  %249 = vadd.xlane.f32.xlu0 %v248
  %v250 = vpop.xlane.xlu0 %249
  %v251 = vrcp.pop 32.0
  %v252 = vmul.f32 %v217, %v251
  %v253 = vmul.f32 %v220, %v251
  %v254 = vmul.f32 %v223, %v251
  %v255 = vmul.f32 %v226, %v251
  %v256 = vmul.f32 %v229, %v251
  %v257 = vmul.f32 %v232, %v251
  %v258 = vmul.f32 %v235, %v251
  %v259 = vmul.f32 %v238, %v251
  %v260 = vmul.f32 %v241, %v251
  %v261 = vmul.f32 %v244, %v251
  %v262 = vmul.f32 %v247, %v251
  %v263 = vmul.f32 %v250, %v251
  %v264 = vsub.f32 %v203, %v252
  %v265 = vsub.f32 %v204, %v253
  %v266 = vsub.f32 %v205, %v254
  %v267 = vsub.f32 %v206, %v255
  %v268 = vsub.f32 %v207, %v256
  %v269 = vsub.f32 %v208, %v257
  %v270 = vsub.f32 %v209, %v258
  %v271 = vsub.f32 %v210, %v259
  %v272 = vsub.f32 %v211, %v260
  %v273 = vsub.f32 %v212, %v261
  %v274 = vsub.f32 %v213, %v262
  %v275 = vsub.f32 %v214, %v263
  %v276 = vmul.f32 %v264, %v264
  %v277 = vmul.f32 %v265, %v265
  %v278 = vmul.f32 %v266, %v266
  %v279 = vmul.f32 %v267, %v267
  %v280 = vmul.f32 %v268, %v268
  %v281 = vmul.f32 %v269, %v269
  %v282 = vmul.f32 %v270, %v270
  %v283 = vmul.f32 %v271, %v271
  %v284 = vmul.f32 %v272, %v272
  %v285 = vmul.f32 %v273, %v273
  %v286 = vmul.f32 %v274, %v274
  %v287 = vmul.f32 %v275, %v275
  %v288 = vsel %vm41, %v276, 0.0
  %289 = vadd.xlane.f32.xlu0 %v288
  %v290 = vpop.xlane.xlu0 %289
  %v291 = vsel %vm41, %v277, 0.0
  %292 = vadd.xlane.f32.xlu0 %v291
  %v293 = vpop.xlane.xlu0 %292
  %v294 = vsel %vm41, %v278, 0.0
  %295 = vadd.xlane.f32.xlu0 %v294
  %v296 = vpop.xlane.xlu0 %295
  %v297 = vsel %vm41, %v279, 0.0
  %298 = vadd.xlane.f32.xlu0 %v297
  %v299 = vpop.xlane.xlu0 %298
  %v300 = vsel %vm41, %v280, 0.0
  %301 = vadd.xlane.f32.xlu0 %v300
  %v302 = vpop.xlane.xlu0 %301
  %v303 = vsel %vm41, %v281, 0.0
  %304 = vadd.xlane.f32.xlu0 %v303
  %v305 = vpop.xlane.xlu0 %304
  %v306 = vsel %vm41, %v282, 0.0
  %307 = vadd.xlane.f32.xlu0 %v306
  %v308 = vpop.xlane.xlu0 %307
  %v309 = vsel %vm41, %v283, 0.0
  %310 = vadd.xlane.f32.xlu0 %v309
  %v311 = vpop.xlane.xlu0 %310
  %v312 = vsel %vm41, %v284, 0.0
  %313 = vadd.xlane.f32.xlu0 %v312
  %v314 = vpop.xlane.xlu0 %313
  %v315 = vsel %vm41, %v285, 0.0
  %316 = vadd.xlane.f32.xlu0 %v315
  %v317 = vpop.xlane.xlu0 %316
  %v318 = vsel %vm41, %v286, 0.0
  %319 = vadd.xlane.f32.xlu0 %v318
  %v320 = vpop.xlane.xlu0 %319
  %v321 = vsel %vm41, %v287, 0.0
  %322 = vadd.xlane.f32.xlu0 %v321
  %v323 = vpop.xlane.xlu0 %322
  %v324 = vmul.f32 %v290, %v251
  %v325 = vmul.f32 %v293, %v251
  %v326 = vmul.f32 %v296, %v251
  %v327 = vmul.f32 %v299, %v251
  %v328 = vmul.f32 %v302, %v251
  %v329 = vmul.f32 %v305, %v251
  %v330 = vmul.f32 %v308, %v251
  %v331 = vmul.f32 %v311, %v251
  %v332 = vmul.f32 %v314, %v251
  %v333 = vmul.f32 %v317, %v251
  %v334 = vmul.f32 %v320, %v251
  %v335 = vmul.f32 %v323, %v251
  %v336 = vadd.f32 %v324, 1e-05
  %v337 = vadd.f32 %v325, 1e-05
  %v338 = vadd.f32 %v326, 1e-05
  %v339 = vadd.f32 %v327, 1e-05
  %v340 = vadd.f32 %v328, 1e-05
  %v341 = vadd.f32 %v329, 1e-05
  %v342 = vadd.f32 %v330, 1e-05
  %v343 = vadd.f32 %v331, 1e-05
  %v344 = vadd.f32 %v332, 1e-05
  %v345 = vadd.f32 %v333, 1e-05
  %v346 = vadd.f32 %v334, 1e-05
  %v347 = vadd.f32 %v335, 1e-05
  %v348 = vrsqrt.pop %v336
  %v349 = vrsqrt.pop %v337
  %v350 = vrsqrt.pop %v338
  %v351 = vrsqrt.pop %v339
  %v352 = vrsqrt.pop %v340
  %v353 = vrsqrt.pop %v341
  %v354 = vrsqrt.pop %v342
  %v355 = vrsqrt.pop %v343
  %v356 = vrsqrt.pop %v344
  %v357 = vrsqrt.pop %v345
  %v358 = vrsqrt.pop %v346
  %v359 = vrsqrt.pop %v347
  %v360 = vmul.f32 %v264, %v348
  %v361 = vmul.f32 %v265, %v349
  %v362 = vmul.f32 %v266, %v350
  %v363 = vmul.f32 %v267, %v351
  %v364 = vmul.f32 %v268, %v352
  %v365 = vmul.f32 %v269, %v353
  %v366 = vmul.f32 %v270, %v354
  %v367 = vmul.f32 %v271, %v355
  %v368 = vmul.f32 %v272, %v356
  %v369 = vmul.f32 %v273, %v357
  %v370 = vmul.f32 %v274, %v358
  %v371 = vmul.f32 %v275, %v359
  %v372 = vlaneseq
  %v373 = vshrl.u32 %v372, 7
  %v374 = vsub.s32 3, %v373
  %v375 = vrot.slane %v32, %v374
  %v376 = vmul.f32 %v360, %v375
  %v377 = vmul.f32 %v361, %v375
  %v378 = vmul.f32 %v362, %v375
  %v379 = vmul.f32 %v363, %v375
  %v380 = vmul.f32 %v364, %v375
  %v381 = vmul.f32 %v365, %v375
  %v382 = vmul.f32 %v366, %v375
  %v383 = vmul.f32 %v367, %v375
  %v384 = vmul.f32 %v368, %v375
  %v385 = vmul.f32 %v369, %v375
  %v386 = vmul.f32 %v370, %v375
  %v387 = vmul.f32 %v371, %v375
  %v388 = vlaneseq
  %v389 = vshrl.u32 %v388, 7
  %v390 = vsub.s32 4, %v389
  %v391 = vrot.slane %v32, %v390
  %v392 = vadd.f32 %v376, %v391
  %v393 = vadd.f32 %v377, %v391
  %v394 = vadd.f32 %v378, %v391
  %v395 = vadd.f32 %v379, %v391
  %v396 = vadd.f32 %v380, %v391
  %v397 = vadd.f32 %v381, %v391
  %v398 = vadd.f32 %v382, %v391
  %v399 = vadd.f32 %v383, %v391
  %v400 = vadd.f32 %v384, %v391
  %v401 = vadd.f32 %v385, %v391
  %v402 = vadd.f32 %v386, %v391
  %v403 = vadd.f32 %v387, %v391
  %v404 = vld [vmem:[%s2] sm:$0xff]
  %v405 = vld [vmem:[%s2 + $0x8] sm:$0xff]
  %v406 = vld [vmem:[%s2 + $0x10] sm:$0xff]
  %v407 = vld [vmem:[%s2 + $0x18] sm:$0xff]
  %v408 = vlaneseq
  %v409 = vshrl.u32 %v408, 7
  %v410 = vsub.s32 1, %v409
  %v411 = vrot.slane %v32, %v410
  %v413 = vsel %vm41, %v392, 0
  %v416 = vsel %vm41, %v393, 0
  %v419 = vsel %vm41, %v394, 0
  %v422 = vsel %vm41, %v395, 0
  %v425 = vsel %vm41, %v396, 0
  %v428 = vsel %vm41, %v397, 0
  %v431 = vsel %vm41, %v398, 0
  %v434 = vsel %vm41, %v399, 0
  %v437 = vsel %vm41, %v400, 0
  %v440 = vsel %vm41, %v401, 0
  %v443 = vsel %vm41, %v402, 0
  %v446 = vsel %vm41, %v403, 0
  %448 = vmatprep.subr.mxu0 0.0
  %449 = vmatpush1.msra.mxu0 0.0
  %450 = vmatprep.subr.mxu0 0.0
  %451 = vmatpush1.msra.mxu0 0.0
  %452 = vmatprep.subr.mxu0 0.0
  %453 = vmatpush1.msra.mxu0 0.0
  %454 = vmatprep.subr.mxu0 0.0
  %455 = vmatpush1.msra.mxu0 0.0
  %456 = vmatprep.subr.mxu0 0.0
  %457 = vmatpush1.msra.mxu0 0.0
  %458 = vmatprep.subr.mxu0 0.0
  %459 = vmatpush1.msra.mxu0 0.0
  %460 = vmatprep.subr.mxu0 0.0
  %461 = vmatpush1.msra.mxu0 0.0
  %462 = vmatprep.subr.mxu0 0.0
  %463 = vmatpush1.msra.mxu0 0.0
  %464 = vmatprep.subr.mxu0 0.0
  %465 = vmatpush1.msra.mxu0 0.0
  %466 = vmatprep.subr.mxu0 0.0
  %467 = vmatpush1.msra.mxu0 0.0
  %468 = vmatprep.subr.mxu0 0.0
  %469 = vmatpush1.msra.mxu0 0.0
  %470 = vmatprep.subr.mxu0 0.0
  %471 = vmatpush1.msra.mxu0 0.0
  %472 = vmatprep.subr.mxu0 0.0
  %473 = vmatpush1.msra.mxu0 %v407
  %474 = vmatprep.subr.mxu0 0.0
  %475 = vmatpush1.msra.mxu0 %v406
  %476 = vmatprep.subr.mxu0 0.0
  %477 = vmatpush1.msra.mxu0 %v405
  %478 = vmatprep.subr.mxu0 0.0
  %479 = vmatpush1.msra.mxu0 %v404
  %480 = vmatprep.subr.mxu0 0.0
  %481 = vmatpush2.msra.mxu0 0.0
  %482 = vmatprep.subr.mxu0 0.0
  %483 = vmatpush2.msra.mxu0 0.0
  %484 = vmatprep.subr.mxu0 0.0
  %485 = vmatpush2.msra.mxu0 0.0
  %486 = vmatprep.subr.mxu0 0.0
  %487 = vmatpush2.msra.mxu0 0.0
  %488 = vmatprep.subr.mxu0 0.0
  %489 = vmatpush2.msra.mxu0 0.0
  %490 = vmatprep.subr.mxu0 0.0
  %491 = vmatpush2.msra.mxu0 0.0
  %492 = vmatprep.subr.mxu0 0.0
  %493 = vmatpush2.msra.mxu0 0.0
  %494 = vmatprep.subr.mxu0 0.0
  %495 = vmatpush2.msra.mxu0 0.0
  %496 = vmatprep.subr.mxu0 0.0
  %497 = vmatpush2.msra.mxu0 0.0
  %498 = vmatprep.subr.mxu0 0.0
  %499 = vmatpush2.msra.mxu0 0.0
  %500 = vmatprep.subr.mxu0 0.0
  %501 = vmatpush2.msra.mxu0 0.0
  %502 = vmatprep.subr.mxu0 0.0
  %503 = vmatpush2.msra.mxu0 0.0
  %504 = vmatprep.subr.mxu0 0.0
  %505 = vmatpush2.msra.mxu0 0.0
  %506 = vmatprep.subr.mxu0 0.0
  %507 = vmatpush2.msra.mxu0 0.0
  %508 = vmatprep.subr.mxu0 0.0
  %509 = vmatpush2.msra.mxu0 0.0
  %510 = vmatprep.subr.mxu0 0.0
  %511 = vmatpush2.msra.mxu0 0.0
  %512 = vmatprep.mubr.f32.mxu0 0.0
  %513 = vmatmul.mubr.f32.gmra.mxu0 %v413
  %v514 = vpop.f32.mrf.mxu0
  %v515 = vadd.f32 %v411, %v514
  %v516 = vpop.f32.mrf.mxu0
  %517 = vmatprep.mubr.f32.mxu0 0.0
  %518 = vmatmul.mubr.f32.gmra.mxu0 %v416
  %v519 = vpop.f32.mrf.mxu0
  %v520 = vadd.f32 %v411, %v519
  %v521 = vpop.f32.mrf.mxu0
  %522 = vmatprep.mubr.f32.mxu0 0.0
  %523 = vmatmul.mubr.f32.gmra.mxu0 %v419
  %v524 = vpop.f32.mrf.mxu0
  %v525 = vadd.f32 %v411, %v524
  %v526 = vpop.f32.mrf.mxu0
  %527 = vmatprep.mubr.f32.mxu0 0.0
  %528 = vmatmul.mubr.f32.gmra.mxu0 %v422
  %v529 = vpop.f32.mrf.mxu0
  %v530 = vadd.f32 %v411, %v529
  %v531 = vpop.f32.mrf.mxu0
  %532 = vmatprep.mubr.f32.mxu0 0.0
  %533 = vmatmul.mubr.f32.gmra.mxu0 %v425
  %v534 = vpop.f32.mrf.mxu0
  %v535 = vadd.f32 %v411, %v534
  %v536 = vpop.f32.mrf.mxu0
  %537 = vmatprep.mubr.f32.mxu0 0.0
  %538 = vmatmul.mubr.f32.gmra.mxu0 %v428
  %v539 = vpop.f32.mrf.mxu0
  %v540 = vadd.f32 %v411, %v539
  %v541 = vpop.f32.mrf.mxu0
  %542 = vmatprep.mubr.f32.mxu0 0.0
  %543 = vmatmul.mubr.f32.gmra.mxu0 %v431
  %v544 = vpop.f32.mrf.mxu0
  %v545 = vadd.f32 %v411, %v544
  %v546 = vpop.f32.mrf.mxu0
  %547 = vmatprep.mubr.f32.mxu0 0.0
  %548 = vmatmul.mubr.f32.gmra.mxu0 %v434
  %v549 = vpop.f32.mrf.mxu0
  %v550 = vadd.f32 %v411, %v549
  %v551 = vpop.f32.mrf.mxu0
  %552 = vmatprep.mubr.f32.mxu0 0.0
  %553 = vmatmul.mubr.f32.gmra.mxu0 %v437
  %v554 = vpop.f32.mrf.mxu0
  %v555 = vadd.f32 %v411, %v554
  %v556 = vpop.f32.mrf.mxu0
  %557 = vmatprep.mubr.f32.mxu0 0.0
  %558 = vmatmul.mubr.f32.gmra.mxu0 %v440
  %v559 = vpop.f32.mrf.mxu0
  %v560 = vadd.f32 %v411, %v559
  %v561 = vpop.f32.mrf.mxu0
  %562 = vmatprep.mubr.f32.mxu0 0.0
  %563 = vmatmul.mubr.f32.gmra.mxu0 %v443
  %v564 = vpop.f32.mrf.mxu0
  %v565 = vadd.f32 %v411, %v564
  %v566 = vpop.f32.mrf.mxu0
  %567 = vmatprep.mubr.f32.mxu0 0.0
  %568 = vmatmul.mubr.f32.gmra.mxu0 %v446
  %v569 = vpop.f32.mrf.mxu0
  %v570 = vadd.f32 %v411, %v569
  %v571 = vpop.f32.mrf.mxu0
  %572 = vdwg.mxu0
  %v573 = vmax.f32 %v515, 0.0
  %v574 = vmax.f32 %v520, 0.0
  %v575 = vmax.f32 %v525, 0.0
  %v576 = vmax.f32 %v530, 0.0
  %v577 = vmax.f32 %v535, 0.0
  %v578 = vmax.f32 %v540, 0.0
  %v579 = vmax.f32 %v545, 0.0
  %v580 = vmax.f32 %v550, 0.0
  %v581 = vmax.f32 %v555, 0.0
  %v582 = vmax.f32 %v560, 0.0
  %v583 = vmax.f32 %v565, 0.0
  %v584 = vmax.f32 %v570, 0.0
  %v585 = vld [vmem:[%s3] sm:$0xff]
  %v586 = vld [vmem:[%s3 + $0x8] sm:$0xff]
  %v587 = vld [vmem:[%s3 + $0x10] sm:$0xff]
  %v588 = vld [vmem:[%s3 + $0x18] sm:$0xff]
  %v589 = vld [vmem:[%s3 + $0x20] sm:$0xff]
  %v590 = vld [vmem:[%s3 + $0x28] sm:$0xff]
  %v591 = vld [vmem:[%s3 + $0x30] sm:$0xff]
  %v592 = vld [vmem:[%s3 + $0x38] sm:$0xff]
  %v593 = vld [vmem:[%s3 + $0x40] sm:$0xff]
  %v594 = vld [vmem:[%s3 + $0x48] sm:$0xff]
  %v595 = vld [vmem:[%s3 + $0x50] sm:$0xff]
  %v596 = vld [vmem:[%s3 + $0x58] sm:$0xff]
  %v597 = vld [vmem:[%s3 + $0x60] sm:$0xff]
  %v598 = vld [vmem:[%s3 + $0x68] sm:$0xff]
  %v599 = vld [vmem:[%s3 + $0x70] sm:$0xff]
  %v600 = vld [vmem:[%s3 + $0x78] sm:$0xff]
  %v601 = vlaneseq
  %v602 = vshrl.u32 %v601, 7
  %v603 = vsub.s32 2, %v602
  %v604 = vrot.slane %v32, %v603
  %605 = vmatprep.subr.mxu0 0.0
  %606 = vmatpush1.msra.mxu0 %v600
  %607 = vmatprep.subr.mxu0 0.0
  %608 = vmatpush1.msra.mxu0 %v599
  %609 = vmatprep.subr.mxu0 0.0
  %610 = vmatpush1.msra.mxu0 %v598
  %611 = vmatprep.subr.mxu0 0.0
  %612 = vmatpush1.msra.mxu0 %v597
  %613 = vmatprep.subr.mxu0 0.0
  %614 = vmatpush1.msra.mxu0 %v596
  %615 = vmatprep.subr.mxu0 0.0
  %616 = vmatpush1.msra.mxu0 %v595
  %617 = vmatprep.subr.mxu0 0.0
  %618 = vmatpush1.msra.mxu0 %v594
  %619 = vmatprep.subr.mxu0 0.0
  %620 = vmatpush1.msra.mxu0 %v593
  %621 = vmatprep.subr.mxu0 0.0
  %622 = vmatpush1.msra.mxu0 %v592
  %623 = vmatprep.subr.mxu0 0.0
  %624 = vmatpush1.msra.mxu0 %v591
  %625 = vmatprep.subr.mxu0 0.0
  %626 = vmatpush1.msra.mxu0 %v590
  %627 = vmatprep.subr.mxu0 0.0
  %628 = vmatpush1.msra.mxu0 %v589
  %629 = vmatprep.subr.mxu0 0.0
  %630 = vmatpush1.msra.mxu0 %v588
  %631 = vmatprep.subr.mxu0 0.0
  %632 = vmatpush1.msra.mxu0 %v587
  %633 = vmatprep.subr.mxu0 0.0
  %634 = vmatpush1.msra.mxu0 %v586
  %635 = vmatprep.subr.mxu0 0.0
  %636 = vmatpush1.msra.mxu0 %v585
  %637 = vmatprep.subr.mxu0 0.0
  %638 = vmatpush2.msra.mxu0 0.0
  %639 = vmatprep.subr.mxu0 0.0
  %640 = vmatpush2.msra.mxu0 0.0
  %641 = vmatprep.subr.mxu0 0.0
  %642 = vmatpush2.msra.mxu0 0.0
  %643 = vmatprep.subr.mxu0 0.0
  %644 = vmatpush2.msra.mxu0 0.0
  %645 = vmatprep.subr.mxu0 0.0
  %646 = vmatpush2.msra.mxu0 0.0
  %647 = vmatprep.subr.mxu0 0.0
  %648 = vmatpush2.msra.mxu0 0.0
  %649 = vmatprep.subr.mxu0 0.0
  %650 = vmatpush2.msra.mxu0 0.0
  %651 = vmatprep.subr.mxu0 0.0
  %652 = vmatpush2.msra.mxu0 0.0
  %653 = vmatprep.subr.mxu0 0.0
  %654 = vmatpush2.msra.mxu0 0.0
  %655 = vmatprep.subr.mxu0 0.0
  %656 = vmatpush2.msra.mxu0 0.0
  %657 = vmatprep.subr.mxu0 0.0
  %658 = vmatpush2.msra.mxu0 0.0
  %659 = vmatprep.subr.mxu0 0.0
  %660 = vmatpush2.msra.mxu0 0.0
  %661 = vmatprep.subr.mxu0 0.0
  %662 = vmatpush2.msra.mxu0 0.0
  %663 = vmatprep.subr.mxu0 0.0
  %664 = vmatpush2.msra.mxu0 0.0
  %665 = vmatprep.subr.mxu0 0.0
  %666 = vmatpush2.msra.mxu0 0.0
  %667 = vmatprep.subr.mxu0 0.0
  %668 = vmatpush2.msra.mxu0 0.0
  %669 = vmatprep.mubr.f32.mxu0 0.0
  %670 = vmatmul.mubr.f32.gmra.mxu0 %v573
  %v671 = vpop.f32.mrf.mxu0
  %v672 = vadd.f32 %v604, %v671
  %v673 = vpop.f32.mrf.mxu0
  %674 = vmatprep.mubr.f32.mxu0 0.0
  %675 = vmatmul.mubr.f32.gmra.mxu0 %v574
  %v676 = vpop.f32.mrf.mxu0
  %v677 = vadd.f32 %v604, %v676
  %v678 = vpop.f32.mrf.mxu0
  %679 = vmatprep.mubr.f32.mxu0 0.0
  %680 = vmatmul.mubr.f32.gmra.mxu0 %v575
  %v681 = vpop.f32.mrf.mxu0
  %v682 = vadd.f32 %v604, %v681
  %v683 = vpop.f32.mrf.mxu0
  %684 = vmatprep.mubr.f32.mxu0 0.0
  %685 = vmatmul.mubr.f32.gmra.mxu0 %v576
  %v686 = vpop.f32.mrf.mxu0
  %v687 = vadd.f32 %v604, %v686
  %v688 = vpop.f32.mrf.mxu0
  %689 = vmatprep.mubr.f32.mxu0 0.0
  %690 = vmatmul.mubr.f32.gmra.mxu0 %v577
  %v691 = vpop.f32.mrf.mxu0
  %v692 = vadd.f32 %v604, %v691
  %v693 = vpop.f32.mrf.mxu0
  %694 = vmatprep.mubr.f32.mxu0 0.0
  %695 = vmatmul.mubr.f32.gmra.mxu0 %v578
  %v696 = vpop.f32.mrf.mxu0
  %v697 = vadd.f32 %v604, %v696
  %v698 = vpop.f32.mrf.mxu0
  %699 = vmatprep.mubr.f32.mxu0 0.0
  %700 = vmatmul.mubr.f32.gmra.mxu0 %v579
  %v701 = vpop.f32.mrf.mxu0
  %v702 = vadd.f32 %v604, %v701
  %v703 = vpop.f32.mrf.mxu0
  %704 = vmatprep.mubr.f32.mxu0 0.0
  %705 = vmatmul.mubr.f32.gmra.mxu0 %v580
  %v706 = vpop.f32.mrf.mxu0
  %v707 = vadd.f32 %v604, %v706
  %v708 = vpop.f32.mrf.mxu0
  %709 = vmatprep.mubr.f32.mxu0 0.0
  %710 = vmatmul.mubr.f32.gmra.mxu0 %v581
  %v711 = vpop.f32.mrf.mxu0
  %v712 = vadd.f32 %v604, %v711
  %v713 = vpop.f32.mrf.mxu0
  %714 = vmatprep.mubr.f32.mxu0 0.0
  %715 = vmatmul.mubr.f32.gmra.mxu0 %v582
  %v716 = vpop.f32.mrf.mxu0
  %v717 = vadd.f32 %v604, %v716
  %v718 = vpop.f32.mrf.mxu0
  %719 = vmatprep.mubr.f32.mxu0 0.0
  %720 = vmatmul.mubr.f32.gmra.mxu0 %v583
  %v721 = vpop.f32.mrf.mxu0
  %v722 = vadd.f32 %v604, %v721
  %v723 = vpop.f32.mrf.mxu0
  %724 = vmatprep.mubr.f32.mxu0 0.0
  %725 = vmatmul.mubr.f32.gmra.mxu0 %v584
  %v726 = vpop.f32.mrf.mxu0
  %v727 = vadd.f32 %v604, %v726
  %v728 = vpop.f32.mrf.mxu0
  %729 = vdwg.mxu0
  %v730 = vadd.f32 %v392, %v672
  %v731 = vadd.f32 %v393, %v677
  %v732 = vadd.f32 %v394, %v682
  %v733 = vadd.f32 %v395, %v687
  %v734 = vadd.f32 %v396, %v692
  %v735 = vadd.f32 %v397, %v697
  %v736 = vadd.f32 %v398, %v702
  %v737 = vadd.f32 %v399, %v707
  %v738 = vadd.f32 %v400, %v712
  %v739 = vadd.f32 %v401, %v717
  %v740 = vadd.f32 %v402, %v722
  %v741 = vadd.f32 %v403, %v727
  %v742 = vsel %vm41, %v730, 0.0
  %743 = vadd.xlane.f32.xlu0 %v742
  %v744 = vpop.xlane.xlu0 %743
  %v745 = vsel %vm41, %v731, 0.0
  %746 = vadd.xlane.f32.xlu0 %v745
  %v747 = vpop.xlane.xlu0 %746
  %v748 = vsel %vm41, %v732, 0.0
  %749 = vadd.xlane.f32.xlu0 %v748
  %v750 = vpop.xlane.xlu0 %749
  %v751 = vsel %vm41, %v733, 0.0
  %752 = vadd.xlane.f32.xlu0 %v751
  %v753 = vpop.xlane.xlu0 %752
  %v754 = vsel %vm41, %v734, 0.0
  %755 = vadd.xlane.f32.xlu0 %v754
  %v756 = vpop.xlane.xlu0 %755
  %v757 = vsel %vm41, %v735, 0.0
  %758 = vadd.xlane.f32.xlu0 %v757
  %v759 = vpop.xlane.xlu0 %758
  %v760 = vsel %vm41, %v736, 0.0
  %761 = vadd.xlane.f32.xlu0 %v760
  %v762 = vpop.xlane.xlu0 %761
  %v763 = vsel %vm41, %v737, 0.0
  %764 = vadd.xlane.f32.xlu0 %v763
  %v765 = vpop.xlane.xlu0 %764
  %v766 = vsel %vm41, %v738, 0.0
  %767 = vadd.xlane.f32.xlu0 %v766
  %v768 = vpop.xlane.xlu0 %767
  %v769 = vsel %vm41, %v739, 0.0
  %770 = vadd.xlane.f32.xlu0 %v769
  %v771 = vpop.xlane.xlu0 %770
  %v772 = vsel %vm41, %v740, 0.0
  %773 = vadd.xlane.f32.xlu0 %v772
  %v774 = vpop.xlane.xlu0 %773
  %v775 = vsel %vm41, %v741, 0.0
  %776 = vadd.xlane.f32.xlu0 %v775
  %v777 = vpop.xlane.xlu0 %776
  %v778 = vmul.f32 %v744, %v251
  %v779 = vmul.f32 %v747, %v251
  %v780 = vmul.f32 %v750, %v251
  %v781 = vmul.f32 %v753, %v251
  %v782 = vmul.f32 %v756, %v251
  %v783 = vmul.f32 %v759, %v251
  %v784 = vmul.f32 %v762, %v251
  %v785 = vmul.f32 %v765, %v251
  %v786 = vmul.f32 %v768, %v251
  %v787 = vmul.f32 %v771, %v251
  %v788 = vmul.f32 %v774, %v251
  %v789 = vmul.f32 %v777, %v251
  %v790 = vsub.f32 %v730, %v778
  %v791 = vsub.f32 %v731, %v779
  %v792 = vsub.f32 %v732, %v780
  %v793 = vsub.f32 %v733, %v781
  %v794 = vsub.f32 %v734, %v782
  %v795 = vsub.f32 %v735, %v783
  %v796 = vsub.f32 %v736, %v784
  %v797 = vsub.f32 %v737, %v785
  %v798 = vsub.f32 %v738, %v786
  %v799 = vsub.f32 %v739, %v787
  %v800 = vsub.f32 %v740, %v788
  %v801 = vsub.f32 %v741, %v789
  %v802 = vmul.f32 %v790, %v790
  %v803 = vmul.f32 %v791, %v791
  %v804 = vmul.f32 %v792, %v792
  %v805 = vmul.f32 %v793, %v793
  %v806 = vmul.f32 %v794, %v794
  %v807 = vmul.f32 %v795, %v795
  %v808 = vmul.f32 %v796, %v796
  %v809 = vmul.f32 %v797, %v797
  %v810 = vmul.f32 %v798, %v798
  %v811 = vmul.f32 %v799, %v799
  %v812 = vmul.f32 %v800, %v800
  %v813 = vmul.f32 %v801, %v801
  %v814 = vsel %vm41, %v802, 0.0
  %815 = vadd.xlane.f32.xlu0 %v814
  %v816 = vpop.xlane.xlu0 %815
  %v817 = vsel %vm41, %v803, 0.0
  %818 = vadd.xlane.f32.xlu0 %v817
  %v819 = vpop.xlane.xlu0 %818
  %v820 = vsel %vm41, %v804, 0.0
  %821 = vadd.xlane.f32.xlu0 %v820
  %v822 = vpop.xlane.xlu0 %821
  %v823 = vsel %vm41, %v805, 0.0
  %824 = vadd.xlane.f32.xlu0 %v823
  %v825 = vpop.xlane.xlu0 %824
  %v826 = vsel %vm41, %v806, 0.0
  %827 = vadd.xlane.f32.xlu0 %v826
  %v828 = vpop.xlane.xlu0 %827
  %v829 = vsel %vm41, %v807, 0.0
  %830 = vadd.xlane.f32.xlu0 %v829
  %v831 = vpop.xlane.xlu0 %830
  %v832 = vsel %vm41, %v808, 0.0
  %833 = vadd.xlane.f32.xlu0 %v832
  %v834 = vpop.xlane.xlu0 %833
  %v835 = vsel %vm41, %v809, 0.0
  %836 = vadd.xlane.f32.xlu0 %v835
  %v837 = vpop.xlane.xlu0 %836
  %v838 = vsel %vm41, %v810, 0.0
  %839 = vadd.xlane.f32.xlu0 %v838
  %v840 = vpop.xlane.xlu0 %839
  %v841 = vsel %vm41, %v811, 0.0
  %842 = vadd.xlane.f32.xlu0 %v841
  %v843 = vpop.xlane.xlu0 %842
  %v844 = vsel %vm41, %v812, 0.0
  %845 = vadd.xlane.f32.xlu0 %v844
  %v846 = vpop.xlane.xlu0 %845
  %v847 = vsel %vm41, %v813, 0.0
  %848 = vadd.xlane.f32.xlu0 %v847
  %v849 = vpop.xlane.xlu0 %848
  %v850 = vmul.f32 %v816, %v251
  %v851 = vmul.f32 %v819, %v251
  %v852 = vmul.f32 %v822, %v251
  %v853 = vmul.f32 %v825, %v251
  %v854 = vmul.f32 %v828, %v251
  %v855 = vmul.f32 %v831, %v251
  %v856 = vmul.f32 %v834, %v251
  %v857 = vmul.f32 %v837, %v251
  %v858 = vmul.f32 %v840, %v251
  %v859 = vmul.f32 %v843, %v251
  %v860 = vmul.f32 %v846, %v251
  %v861 = vmul.f32 %v849, %v251
  %v862 = vadd.f32 %v850, 1e-05
  %v863 = vadd.f32 %v851, 1e-05
  %v864 = vadd.f32 %v852, 1e-05
  %v865 = vadd.f32 %v853, 1e-05
  %v866 = vadd.f32 %v854, 1e-05
  %v867 = vadd.f32 %v855, 1e-05
  %v868 = vadd.f32 %v856, 1e-05
  %v869 = vadd.f32 %v857, 1e-05
  %v870 = vadd.f32 %v858, 1e-05
  %v871 = vadd.f32 %v859, 1e-05
  %v872 = vadd.f32 %v860, 1e-05
  %v873 = vadd.f32 %v861, 1e-05
  %v874 = vrsqrt.pop %v862
  %v875 = vrsqrt.pop %v863
  %v876 = vrsqrt.pop %v864
  %v877 = vrsqrt.pop %v865
  %v878 = vrsqrt.pop %v866
  %v879 = vrsqrt.pop %v867
  %v880 = vrsqrt.pop %v868
  %v881 = vrsqrt.pop %v869
  %v882 = vrsqrt.pop %v870
  %v883 = vrsqrt.pop %v871
  %v884 = vrsqrt.pop %v872
  %v885 = vrsqrt.pop %v873
  %v886 = vmul.f32 %v790, %v874
  %v887 = vmul.f32 %v791, %v875
  %v888 = vmul.f32 %v792, %v876
  %v889 = vmul.f32 %v793, %v877
  %v890 = vmul.f32 %v794, %v878
  %v891 = vmul.f32 %v795, %v879
  %v892 = vmul.f32 %v796, %v880
  %v893 = vmul.f32 %v797, %v881
  %v894 = vmul.f32 %v798, %v882
  %v895 = vmul.f32 %v799, %v883
  %v896 = vmul.f32 %v800, %v884
  %v897 = vmul.f32 %v801, %v885
  %v898 = vlaneseq
  %v899 = vshrl.u32 %v898, 7
  %v900 = vsub.s32 5, %v899
  %v901 = vrot.slane %v32, %v900
  %v902 = vmul.f32 %v886, %v901
  %v903 = vmul.f32 %v887, %v901
  %v904 = vmul.f32 %v888, %v901
  %v905 = vmul.f32 %v889, %v901
  %v906 = vmul.f32 %v890, %v901
  %v907 = vmul.f32 %v891, %v901
  %v908 = vmul.f32 %v892, %v901
  %v909 = vmul.f32 %v893, %v901
  %v910 = vmul.f32 %v894, %v901
  %v911 = vmul.f32 %v895, %v901
  %v912 = vmul.f32 %v896, %v901
  %v913 = vmul.f32 %v897, %v901
  %v914 = vlaneseq
  %v915 = vshrl.u32 %v914, 7
  %v916 = vsub.s32 6, %v915
  %v917 = vrot.slane %v32, %v916
  %v918 = vadd.f32 %v902, %v917
  %v919 = vadd.f32 %v903, %v917
  %v920 = vadd.f32 %v904, %v917
  %v921 = vadd.f32 %v905, %v917
  %v922 = vadd.f32 %v906, %v917
  %v923 = vadd.f32 %v907, %v917
  %v924 = vadd.f32 %v908, %v917
  %v925 = vadd.f32 %v909, %v917
  %v926 = vadd.f32 %v910, %v917
  %v927 = vadd.f32 %v911, %v917
  %v928 = vadd.f32 %v912, %v917
  %v929 = vadd.f32 %v913, %v917
  %930 = vst.msk [vmem:[%s5] sm:$0xff] %vm41, %v918
  %931 = vst.msk [vmem:[%s5 + $0x8] sm:$0xff] %vm41, %v919
  %932 = vst.msk [vmem:[%s5 + $0x10] sm:$0xff] %vm41, %v920
  %933 = vst.msk [vmem:[%s5 + $0x18] sm:$0xff] %vm41, %v921
  %934 = vst.msk [vmem:[%s5 + $0x20] sm:$0xff] %vm41, %v922
  %935 = vst.msk [vmem:[%s5 + $0x28] sm:$0xff] %vm41, %v923
  %936 = vst.msk [vmem:[%s5 + $0x30] sm:$0xff] %vm41, %v924
  %937 = vst.msk [vmem:[%s5 + $0x38] sm:$0xff] %vm41, %v925
  %938 = vst.msk [vmem:[%s5 + $0x40] sm:$0xff] %vm41, %v926
  %939 = vst.msk [vmem:[%s5 + $0x48] sm:$0xff] %vm41, %v927
  %940 = vst.msk [vmem:[%s5 + $0x50] sm:$0xff] %vm41, %v928
  %941 = vst.msk [vmem:[%s5 + $0x58] sm:$0xff] %vm41, %v929
  // Predicated region
  $region22: #{tpu_custom_call.1} parent=0 // pred_check
    _
  $region23: #{tpu_custom_call.1} parent=0 // pred_check_branch
    %943 = sbr.rel (0) target = $region25
  $region24: #{tpu_custom_call.1} parent=0 // pred_region
    _
  $region25: #{tpu_custom_call.1} parent=0 // pred_fallthru
    _
  // Predicated region
  $region26: #{tpu_custom_call.1} parent=0 // pred_check
    _
  $region27: #{tpu_custom_call.1} parent=0 // pred_check_branch
    %945 = sbr.rel (0) target = $region29
  $region28: #{tpu_custom_call.1} parent=0 // pred_region
    _
  $region29: #{tpu_custom_call.1} parent=0 // pred_fallthru
    _

// kernel: tpu_custom_call.1
$region0: #{tpu_custom_call.1}
  #allocation0 [shape = 'u32[]', space=smem, size = 0x4, offset = 0x4, fixed_abs, tag = 'smem constant byte address 0x4 - core index']
  #allocation1 [shape = 'u32[144,128]{1,0:T(1,128)}', space=vmem, size = 0x12000, scoped, tag = 'internal scratch']
  %s0 = inlined_call_operand.vmem [shape: f32[96,32], index: 0, kind: input, shape index: {}]
  %s1 = inlined_call_operand.vmem [shape: f32[32,32], index: 1, kind: input, shape index: {}]
  %s2 = inlined_call_operand.vmem [shape: f32[32,128], index: 2, kind: input, shape index: {}]
  %s3 = inlined_call_operand.vmem [shape: f32[128,32], index: 3, kind: input, shape index: {}]
  %s4 = inlined_call_operand.vmem [shape: f32[8,128], index: 4, kind: input, shape index: {}]
  %s5 = inlined_call_operand.vmem [shape: f32[96,32], index: 5, kind: output, shape index: {}]
  %s6 = sld [smem:[#allocation0]]
  $region30: #{tpu_custom_call.1} parent=0
    _
  %s8 = ssub.s32 1, %s6
  %s9 = scalar_select 0, %s8, %s6
  // Predicated region
  $region2: #{tpu_custom_call.1} parent=0 // pred_check
    _
  $region3: #{tpu_custom_call.1} parent=0 // pred_check_branch
    %11 = sbr.rel (0) target = $region5
  $region4: #{tpu_custom_call.1} parent=0 // pred_region
    _
  $region5: #{tpu_custom_call.1} parent=0 // pred_fallthru
    _
  // Predicated region
  $region6: #{tpu_custom_call.1} parent=0 // pred_check
    _
  $region7: #{tpu_custom_call.1} parent=0 // pred_check_branch
    %13 = sbr.rel (0) target = $region9
  $region8: #{tpu_custom_call.1} parent=0 // pred_region
    _
  $region9: #{tpu_custom_call.1} parent=0 // pred_fallthru
    _
  // Predicated region
  $region10: #{tpu_custom_call.1} parent=0 // pred_check
    _
  $region11: #{tpu_custom_call.1} parent=0 // pred_check_branch
    %15 = sbr.rel (0) target = $region13
  $region12: #{tpu_custom_call.1} parent=0 // pred_region
    _
  $region13: #{tpu_custom_call.1} parent=0 // pred_fallthru
    _
  // Predicated region
  $region14: #{tpu_custom_call.1} parent=0 // pred_check
    _
  $region15: #{tpu_custom_call.1} parent=0 // pred_check_branch
    %17 = sbr.rel (0) target = $region17
  $region16: #{tpu_custom_call.1} parent=0 // pred_region
    _
  $region17: #{tpu_custom_call.1} parent=0 // pred_fallthru
    _
  // Predicated region
  $region18: #{tpu_custom_call.1} parent=0 // pred_check
    _
  $region19: #{tpu_custom_call.1} parent=0 // pred_check_branch
    %19 = sbr.rel (0) target = $region21
  $region20: #{tpu_custom_call.1} parent=0 // pred_region
    _
  $region21: #{tpu_custom_call.1} parent=0 // pred_fallthru
    _
  %v20 = vld [vmem:[%s0] sm:$0xff]
  %v21 = vld [vmem:[%s0 + $0x8] sm:$0xff]
  %v22 = vld [vmem:[%s0 + $0x10] sm:$0xff]
  %v23 = vld [vmem:[%s0 + $0x18] sm:$0xff]
  %v24 = vld [vmem:[%s0 + $0x20] sm:$0xff]
  %v25 = vld [vmem:[%s0 + $0x28] sm:$0xff]
  %v26 = vld [vmem:[%s0 + $0x30] sm:$0xff]
  %v27 = vld [vmem:[%s0 + $0x38] sm:$0xff]
  %v28 = vld [vmem:[%s0 + $0x40] sm:$0xff]
  %v29 = vld [vmem:[%s0 + $0x48] sm:$0xff]
  %v30 = vld [vmem:[%s0 + $0x50] sm:$0xff]
  %v31 = vld [vmem:[%s0 + $0x58] sm:$0xff]
  %v32 = vld [vmem:[%s4] sm:$0xff]
  %v33 = vld [vmem:[%s1] sm:$0xff]
  %v34 = vld [vmem:[%s1 + $0x8] sm:$0xff]
  %v35 = vld [vmem:[%s1 + $0x10] sm:$0xff]
  %v36 = vld [vmem:[%s1 + $0x18] sm:$0xff]
  %v37 = vlaneseq
  %v38 = vshrl.u32 %v37, 7
  %v39 = vsub.s32 0, %v38
  %v40 = vrot.slane %v32, %v39
  %vm41 = vcmask 261120
  %v43 = vsel %vm41, %v20, 0
  %v46 = vsel %vm41, %v21, 0
  %v49 = vsel %vm41, %v22, 0
  %v52 = vsel %vm41, %v23, 0
  %v55 = vsel %vm41, %v24, 0
  %v58 = vsel %vm41, %v25, 0
  %v61 = vsel %vm41, %v26, 0
  %v64 = vsel %vm41, %v27, 0
  %v67 = vsel %vm41, %v28, 0
  %v70 = vsel %vm41, %v29, 0
  %v73 = vsel %vm41, %v30, 0
  %v76 = vsel %vm41, %v31, 0
  %78 = vmatprep.subr.mxu0 0.0
  %79 = vmatpush1.msra.mxu0 0.0
  %80 = vmatprep.subr.mxu0 0.0
  %81 = vmatpush1.msra.mxu0 0.0
  %82 = vmatprep.subr.mxu0 0.0
  %83 = vmatpush1.msra.mxu0 0.0
  %84 = vmatprep.subr.mxu0 0.0
  %85 = vmatpush1.msra.mxu0 0.0
  %86 = vmatprep.subr.mxu0 0.0
  %87 = vmatpush1.msra.mxu0 0.0
  %88 = vmatprep.subr.mxu0 0.0
  %89 = vmatpush1.msra.mxu0 0.0
  %90 = vmatprep.subr.mxu0 0.0
  %91 = vmatpush1.msra.mxu0 0.0
  %92 = vmatprep.subr.mxu0 0.0
  %93 = vmatpush1.msra.mxu0 0.0
  %94 = vmatprep.subr.mxu0 0.0
  %95 = vmatpush1.msra.mxu0 0.0
  %96 = vmatprep.subr.mxu0 0.0
  %97 = vmatpush1.msra.mxu0 0.0
  %98 = vmatprep.subr.mxu0 0.0
  %99 = vmatpush1.msra.mxu0 0.0
  %100 = vmatprep.subr.mxu0 0.0
  %101 = vmatpush1.msra.mxu0 0.0
  %102 = vmatprep.subr.mxu0 0.0
  %103 = vmatpush1.msra.mxu0 %v36
  %104 = vmatprep.subr.mxu0 0.0
  %105 = vmatpush1.msra.mxu0 %v35
  %106 = vmatprep.subr.mxu0 0.0
  %107 = vmatpush1.msra.mxu0 %v34
  %108 = vmatprep.subr.mxu0 0.0
  %109 = vmatpush1.msra.mxu0 %v33
  %110 = vmatprep.subr.mxu0 0.0
  %111 = vmatpush2.msra.mxu0 0.0
  %112 = vmatprep.subr.mxu0 0.0
  %113 = vmatpush2.msra.mxu0 0.0
  %114 = vmatprep.subr.mxu0 0.0
  %115 = vmatpush2.msra.mxu0 0.0
  %116 = vmatprep.subr.mxu0 0.0
  %117 = vmatpush2.msra.mxu0 0.0
  %118 = vmatprep.subr.mxu0 0.0
  %119 = vmatpush2.msra.mxu0 0.0
  %120 = vmatprep.subr.mxu0 0.0
  %121 = vmatpush2.msra.mxu0 0.0
  %122 = vmatprep.subr.mxu0 0.0
  %123 = vmatpush2.msra.mxu0 0.0
  %124 = vmatprep.subr.mxu0 0.0
  %125 = vmatpush2.msra.mxu0 0.0
  %126 = vmatprep.subr.mxu0 0.0
  %127 = vmatpush2.msra.mxu0 0.0
  %128 = vmatprep.subr.mxu0 0.0
  %129 = vmatpush2.msra.mxu0 0.0
  %130 = vmatprep.subr.mxu0 0.0
  %131 = vmatpush2.msra.mxu0 0.0
  %132 = vmatprep.subr.mxu0 0.0
  %133 = vmatpush2.msra.mxu0 0.0
  %134 = vmatprep.subr.mxu0 0.0
  %135 = vmatpush2.msra.mxu0 0.0
  %136 = vmatprep.subr.mxu0 0.0
  %137 = vmatpush2.msra.mxu0 0.0
  %138 = vmatprep.subr.mxu0 0.0
  %139 = vmatpush2.msra.mxu0 0.0
  %140 = vmatprep.subr.mxu0 0.0
  %141 = vmatpush2.msra.mxu0 0.0
  %142 = vmatprep.mubr.f32.mxu0 0.0
  %143 = vmatmul.mubr.f32.gmra.mxu0 %v43
  %v144 = vpop.f32.mrf.mxu0
  %v145 = vadd.f32 %v40, %v144
  %v146 = vpop.f32.mrf.mxu0
  %147 = vmatprep.mubr.f32.mxu0 0.0
  %148 = vmatmul.mubr.f32.gmra.mxu0 %v46
  %v149 = vpop.f32.mrf.mxu0
  %v150 = vadd.f32 %v40, %v149
  %v151 = vpop.f32.mrf.mxu0
  %152 = vmatprep.mubr.f32.mxu0 0.0
  %153 = vmatmul.mubr.f32.gmra.mxu0 %v49
  %v154 = vpop.f32.mrf.mxu0
  %v155 = vadd.f32 %v40, %v154
  %v156 = vpop.f32.mrf.mxu0
  %157 = vmatprep.mubr.f32.mxu0 0.0
  %158 = vmatmul.mubr.f32.gmra.mxu0 %v52
  %v159 = vpop.f32.mrf.mxu0
  %v160 = vadd.f32 %v40, %v159
  %v161 = vpop.f32.mrf.mxu0
  %162 = vmatprep.mubr.f32.mxu0 0.0
  %163 = vmatmul.mubr.f32.gmra.mxu0 %v55
  %v164 = vpop.f32.mrf.mxu0
  %v165 = vadd.f32 %v40, %v164
  %v166 = vpop.f32.mrf.mxu0
  %167 = vmatprep.mubr.f32.mxu0 0.0
  %168 = vmatmul.mubr.f32.gmra.mxu0 %v58
  %v169 = vpop.f32.mrf.mxu0
  %v170 = vadd.f32 %v40, %v169
  %v171 = vpop.f32.mrf.mxu0
  %172 = vmatprep.mubr.f32.mxu0 0.0
  %173 = vmatmul.mubr.f32.gmra.mxu0 %v61
  %v174 = vpop.f32.mrf.mxu0
  %v175 = vadd.f32 %v40, %v174
  %v176 = vpop.f32.mrf.mxu0
  %177 = vmatprep.mubr.f32.mxu0 0.0
  %178 = vmatmul.mubr.f32.gmra.mxu0 %v64
  %v179 = vpop.f32.mrf.mxu0
  %v180 = vadd.f32 %v40, %v179
  %v181 = vpop.f32.mrf.mxu0
  %182 = vmatprep.mubr.f32.mxu0 0.0
  %183 = vmatmul.mubr.f32.gmra.mxu0 %v67
  %v184 = vpop.f32.mrf.mxu0
  %v185 = vadd.f32 %v40, %v184
  %v186 = vpop.f32.mrf.mxu0
  %187 = vmatprep.mubr.f32.mxu0 0.0
  %188 = vmatmul.mubr.f32.gmra.mxu0 %v70
  %v189 = vpop.f32.mrf.mxu0
  %v190 = vadd.f32 %v40, %v189
  %v191 = vpop.f32.mrf.mxu0
  %192 = vmatprep.mubr.f32.mxu0 0.0
  %193 = vmatmul.mubr.f32.gmra.mxu0 %v73
  %v194 = vpop.f32.mrf.mxu0
  %v195 = vadd.f32 %v40, %v194
  %v196 = vpop.f32.mrf.mxu0
  %197 = vmatprep.mubr.f32.mxu0 0.0
  %198 = vmatmul.mubr.f32.gmra.mxu0 %v76
  %v199 = vpop.f32.mrf.mxu0
  %v200 = vadd.f32 %v40, %v199
  %v201 = vpop.f32.mrf.mxu0
  %202 = vdwg.mxu0
  %v203 = vadd.f32 %v20, %v145
  %v204 = vadd.f32 %v21, %v150
  %v205 = vadd.f32 %v22, %v155
  %v206 = vadd.f32 %v23, %v160
  %v207 = vadd.f32 %v24, %v165
  %v208 = vadd.f32 %v25, %v170
  %v209 = vadd.f32 %v26, %v175
  %v210 = vadd.f32 %v27, %v180
  %v211 = vadd.f32 %v28, %v185
  %v212 = vadd.f32 %v29, %v190
  %v213 = vadd.f32 %v30, %v195
  %v214 = vadd.f32 %v31, %v200
  %v215 = vsel %vm41, %v203, 0.0
  %216 = vadd.xlane.f32.xlu0 %v215
  %v217 = vpop.xlane.xlu0 %216
  %v218 = vsel %vm41, %v204, 0.0
  %219 = vadd.xlane.f32.xlu0 %v218
  %v220 = vpop.xlane.xlu0 %219
  %v221 = vsel %vm41, %v205, 0.0
  %222 = vadd.xlane.f32.xlu0 %v221
  %v223 = vpop.xlane.xlu0 %222
  %v224 = vsel %vm41, %v206, 0.0
  %225 = vadd.xlane.f32.xlu0 %v224
  %v226 = vpop.xlane.xlu0 %225
  %v227 = vsel %vm41, %v207, 0.0
  %228 = vadd.xlane.f32.xlu0 %v227
  %v229 = vpop.xlane.xlu0 %228
  %v230 = vsel %vm41, %v208, 0.0
  %231 = vadd.xlane.f32.xlu0 %v230
  %v232 = vpop.xlane.xlu0 %231
  %v233 = vsel %vm41, %v209, 0.0
  %234 = vadd.xlane.f32.xlu0 %v233
  %v235 = vpop.xlane.xlu0 %234
  %v236 = vsel %vm41, %v210, 0.0
  %237 = vadd.xlane.f32.xlu0 %v236
  %v238 = vpop.xlane.xlu0 %237
  %v239 = vsel %vm41, %v211, 0.0
  %240 = vadd.xlane.f32.xlu0 %v239
  %v241 = vpop.xlane.xlu0 %240
  %v242 = vsel %vm41, %v212, 0.0
  %243 = vadd.xlane.f32.xlu0 %v242
  %v244 = vpop.xlane.xlu0 %243
  %v245 = vsel %vm41, %v213, 0.0
  %246 = vadd.xlane.f32.xlu0 %v245
  %v247 = vpop.xlane.xlu0 %246
  %v248 = vsel %vm41, %v214, 0.0
  %249 = vadd.xlane.f32.xlu0 %v248
  %v250 = vpop.xlane.xlu0 %249
  %v251 = vrcp.pop 32.0
  %v252 = vmul.f32 %v217, %v251
  %v253 = vmul.f32 %v220, %v251
  %v254 = vmul.f32 %v223, %v251
  %v255 = vmul.f32 %v226, %v251
  %v256 = vmul.f32 %v229, %v251
  %v257 = vmul.f32 %v232, %v251
  %v258 = vmul.f32 %v235, %v251
  %v259 = vmul.f32 %v238, %v251
  %v260 = vmul.f32 %v241, %v251
  %v261 = vmul.f32 %v244, %v251
  %v262 = vmul.f32 %v247, %v251
  %v263 = vmul.f32 %v250, %v251
  %v264 = vsub.f32 %v203, %v252
  %v265 = vsub.f32 %v204, %v253
  %v266 = vsub.f32 %v205, %v254
  %v267 = vsub.f32 %v206, %v255
  %v268 = vsub.f32 %v207, %v256
  %v269 = vsub.f32 %v208, %v257
  %v270 = vsub.f32 %v209, %v258
  %v271 = vsub.f32 %v210, %v259
  %v272 = vsub.f32 %v211, %v260
  %v273 = vsub.f32 %v212, %v261
  %v274 = vsub.f32 %v213, %v262
  %v275 = vsub.f32 %v214, %v263
  %v276 = vmul.f32 %v264, %v264
  %v277 = vmul.f32 %v265, %v265
  %v278 = vmul.f32 %v266, %v266
  %v279 = vmul.f32 %v267, %v267
  %v280 = vmul.f32 %v268, %v268
  %v281 = vmul.f32 %v269, %v269
  %v282 = vmul.f32 %v270, %v270
  %v283 = vmul.f32 %v271, %v271
  %v284 = vmul.f32 %v272, %v272
  %v285 = vmul.f32 %v273, %v273
  %v286 = vmul.f32 %v274, %v274
  %v287 = vmul.f32 %v275, %v275
  %v288 = vsel %vm41, %v276, 0.0
  %289 = vadd.xlane.f32.xlu0 %v288
  %v290 = vpop.xlane.xlu0 %289
  %v291 = vsel %vm41, %v277, 0.0
  %292 = vadd.xlane.f32.xlu0 %v291
  %v293 = vpop.xlane.xlu0 %292
  %v294 = vsel %vm41, %v278, 0.0
  %295 = vadd.xlane.f32.xlu0 %v294
  %v296 = vpop.xlane.xlu0 %295
  %v297 = vsel %vm41, %v279, 0.0
  %298 = vadd.xlane.f32.xlu0 %v297
  %v299 = vpop.xlane.xlu0 %298
  %v300 = vsel %vm41, %v280, 0.0
  %301 = vadd.xlane.f32.xlu0 %v300
  %v302 = vpop.xlane.xlu0 %301
  %v303 = vsel %vm41, %v281, 0.0
  %304 = vadd.xlane.f32.xlu0 %v303
  %v305 = vpop.xlane.xlu0 %304
  %v306 = vsel %vm41, %v282, 0.0
  %307 = vadd.xlane.f32.xlu0 %v306
  %v308 = vpop.xlane.xlu0 %307
  %v309 = vsel %vm41, %v283, 0.0
  %310 = vadd.xlane.f32.xlu0 %v309
  %v311 = vpop.xlane.xlu0 %310
  %v312 = vsel %vm41, %v284, 0.0
  %313 = vadd.xlane.f32.xlu0 %v312
  %v314 = vpop.xlane.xlu0 %313
  %v315 = vsel %vm41, %v285, 0.0
  %316 = vadd.xlane.f32.xlu0 %v315
  %v317 = vpop.xlane.xlu0 %316
  %v318 = vsel %vm41, %v286, 0.0
  %319 = vadd.xlane.f32.xlu0 %v318
  %v320 = vpop.xlane.xlu0 %319
  %v321 = vsel %vm41, %v287, 0.0
  %322 = vadd.xlane.f32.xlu0 %v321
  %v323 = vpop.xlane.xlu0 %322
  %v324 = vmul.f32 %v290, %v251
  %v325 = vmul.f32 %v293, %v251
  %v326 = vmul.f32 %v296, %v251
  %v327 = vmul.f32 %v299, %v251
  %v328 = vmul.f32 %v302, %v251
  %v329 = vmul.f32 %v305, %v251
  %v330 = vmul.f32 %v308, %v251
  %v331 = vmul.f32 %v311, %v251
  %v332 = vmul.f32 %v314, %v251
  %v333 = vmul.f32 %v317, %v251
  %v334 = vmul.f32 %v320, %v251
  %v335 = vmul.f32 %v323, %v251
  %v336 = vadd.f32 %v324, 1e-05
  %v337 = vadd.f32 %v325, 1e-05
  %v338 = vadd.f32 %v326, 1e-05
  %v339 = vadd.f32 %v327, 1e-05
  %v340 = vadd.f32 %v328, 1e-05
  %v341 = vadd.f32 %v329, 1e-05
  %v342 = vadd.f32 %v330, 1e-05
  %v343 = vadd.f32 %v331, 1e-05
  %v344 = vadd.f32 %v332, 1e-05
  %v345 = vadd.f32 %v333, 1e-05
  %v346 = vadd.f32 %v334, 1e-05
  %v347 = vadd.f32 %v335, 1e-05
  %v348 = vrsqrt.pop %v336
  %v349 = vrsqrt.pop %v337
  %v350 = vrsqrt.pop %v338
  %v351 = vrsqrt.pop %v339
  %v352 = vrsqrt.pop %v340
  %v353 = vrsqrt.pop %v341
  %v354 = vrsqrt.pop %v342
  %v355 = vrsqrt.pop %v343
  %v356 = vrsqrt.pop %v344
  %v357 = vrsqrt.pop %v345
  %v358 = vrsqrt.pop %v346
  %v359 = vrsqrt.pop %v347
  %v360 = vmul.f32 %v264, %v348
  %v361 = vmul.f32 %v265, %v349
  %v362 = vmul.f32 %v266, %v350
  %v363 = vmul.f32 %v267, %v351
  %v364 = vmul.f32 %v268, %v352
  %v365 = vmul.f32 %v269, %v353
  %v366 = vmul.f32 %v270, %v354
  %v367 = vmul.f32 %v271, %v355
  %v368 = vmul.f32 %v272, %v356
  %v369 = vmul.f32 %v273, %v357
  %v370 = vmul.f32 %v274, %v358
  %v371 = vmul.f32 %v275, %v359
  %v372 = vlaneseq
  %v373 = vshrl.u32 %v372, 7
  %v374 = vsub.s32 3, %v373
  %v375 = vrot.slane %v32, %v374
  %v376 = vmul.f32 %v360, %v375
  %v377 = vmul.f32 %v361, %v375
  %v378 = vmul.f32 %v362, %v375
  %v379 = vmul.f32 %v363, %v375
  %v380 = vmul.f32 %v364, %v375
  %v381 = vmul.f32 %v365, %v375
  %v382 = vmul.f32 %v366, %v375
  %v383 = vmul.f32 %v367, %v375
  %v384 = vmul.f32 %v368, %v375
  %v385 = vmul.f32 %v369, %v375
  %v386 = vmul.f32 %v370, %v375
  %v387 = vmul.f32 %v371, %v375
  %v388 = vlaneseq
  %v389 = vshrl.u32 %v388, 7
  %v390 = vsub.s32 4, %v389
  %v391 = vrot.slane %v32, %v390
  %v392 = vadd.f32 %v376, %v391
  %v393 = vadd.f32 %v377, %v391
  %v394 = vadd.f32 %v378, %v391
  %v395 = vadd.f32 %v379, %v391
  %v396 = vadd.f32 %v380, %v391
  %v397 = vadd.f32 %v381, %v391
  %v398 = vadd.f32 %v382, %v391
  %v399 = vadd.f32 %v383, %v391
  %v400 = vadd.f32 %v384, %v391
  %v401 = vadd.f32 %v385, %v391
  %v402 = vadd.f32 %v386, %v391
  %v403 = vadd.f32 %v387, %v391
  %v404 = vld [vmem:[%s2] sm:$0xff]
  %v405 = vld [vmem:[%s2 + $0x8] sm:$0xff]
  %v406 = vld [vmem:[%s2 + $0x10] sm:$0xff]
  %v407 = vld [vmem:[%s2 + $0x18] sm:$0xff]
  %v408 = vlaneseq
  %v409 = vshrl.u32 %v408, 7
  %v410 = vsub.s32 1, %v409
  %v411 = vrot.slane %v32, %v410
  %v413 = vsel %vm41, %v392, 0
  %v416 = vsel %vm41, %v393, 0
  %v419 = vsel %vm41, %v394, 0
  %v422 = vsel %vm41, %v395, 0
  %v425 = vsel %vm41, %v396, 0
  %v428 = vsel %vm41, %v397, 0
  %v431 = vsel %vm41, %v398, 0
  %v434 = vsel %vm41, %v399, 0
  %v437 = vsel %vm41, %v400, 0
  %v440 = vsel %vm41, %v401, 0
  %v443 = vsel %vm41, %v402, 0
  %v446 = vsel %vm41, %v403, 0
  %448 = vmatprep.subr.mxu0 0.0
  %449 = vmatpush1.msra.mxu0 0.0
  %450 = vmatprep.subr.mxu0 0.0
  %451 = vmatpush1.msra.mxu0 0.0
  %452 = vmatprep.subr.mxu0 0.0
  %453 = vmatpush1.msra.mxu0 0.0
  %454 = vmatprep.subr.mxu0 0.0
  %455 = vmatpush1.msra.mxu0 0.0
  %456 = vmatprep.subr.mxu0 0.0
  %457 = vmatpush1.msra.mxu0 0.0
  %458 = vmatprep.subr.mxu0 0.0
  %459 = vmatpush1.msra.mxu0 0.0
  %460 = vmatprep.subr.mxu0 0.0
  %461 = vmatpush1.msra.mxu0 0.0
  %462 = vmatprep.subr.mxu0 0.0
  %463 = vmatpush1.msra.mxu0 0.0
  %464 = vmatprep.subr.mxu0 0.0
  %465 = vmatpush1.msra.mxu0 0.0
  %466 = vmatprep.subr.mxu0 0.0
  %467 = vmatpush1.msra.mxu0 0.0
  %468 = vmatprep.subr.mxu0 0.0
  %469 = vmatpush1.msra.mxu0 0.0
  %470 = vmatprep.subr.mxu0 0.0
  %471 = vmatpush1.msra.mxu0 0.0
  %472 = vmatprep.subr.mxu0 0.0
  %473 = vmatpush1.msra.mxu0 %v407
  %474 = vmatprep.subr.mxu0 0.0
  %475 = vmatpush1.msra.mxu0 %v406
  %476 = vmatprep.subr.mxu0 0.0
  %477 = vmatpush1.msra.mxu0 %v405
  %478 = vmatprep.subr.mxu0 0.0
  %479 = vmatpush1.msra.mxu0 %v404
  %480 = vmatprep.subr.mxu0 0.0
  %481 = vmatpush2.msra.mxu0 0.0
  %482 = vmatprep.subr.mxu0 0.0
  %483 = vmatpush2.msra.mxu0 0.0
  %484 = vmatprep.subr.mxu0 0.0
  %485 = vmatpush2.msra.mxu0 0.0
  %486 = vmatprep.subr.mxu0 0.0
  %487 = vmatpush2.msra.mxu0 0.0
  %488 = vmatprep.subr.mxu0 0.0
  %489 = vmatpush2.msra.mxu0 0.0
  %490 = vmatprep.subr.mxu0 0.0
  %491 = vmatpush2.msra.mxu0 0.0
  %492 = vmatprep.subr.mxu0 0.0
  %493 = vmatpush2.msra.mxu0 0.0
  %494 = vmatprep.subr.mxu0 0.0
  %495 = vmatpush2.msra.mxu0 0.0
  %496 = vmatprep.subr.mxu0 0.0
  %497 = vmatpush2.msra.mxu0 0.0
  %498 = vmatprep.subr.mxu0 0.0
  %499 = vmatpush2.msra.mxu0 0.0
  %500 = vmatprep.subr.mxu0 0.0
  %501 = vmatpush2.msra.mxu0 0.0
  %502 = vmatprep.subr.mxu0 0.0
  %503 = vmatpush2.msra.mxu0 0.0
  %504 = vmatprep.subr.mxu0 0.0
  %505 = vmatpush2.msra.mxu0 0.0
  %506 = vmatprep.subr.mxu0 0.0
  %507 = vmatpush2.msra.mxu0 0.0
  %508 = vmatprep.subr.mxu0 0.0
  %509 = vmatpush2.msra.mxu0 0.0
  %510 = vmatprep.subr.mxu0 0.0
  %511 = vmatpush2.msra.mxu0 0.0
  %512 = vmatprep.mubr.f32.mxu0 0.0
  %513 = vmatmul.mubr.f32.gmra.mxu0 %v413
  %v514 = vpop.f32.mrf.mxu0
  %v515 = vadd.f32 %v411, %v514
  %v516 = vpop.f32.mrf.mxu0
  %517 = vmatprep.mubr.f32.mxu0 0.0
  %518 = vmatmul.mubr.f32.gmra.mxu0 %v416
  %v519 = vpop.f32.mrf.mxu0
  %v520 = vadd.f32 %v411, %v519
  %v521 = vpop.f32.mrf.mxu0
  %522 = vmatprep.mubr.f32.mxu0 0.0
  %523 = vmatmul.mubr.f32.gmra.mxu0 %v419
  %v524 = vpop.f32.mrf.mxu0
  %v525 = vadd.f32 %v411, %v524
  %v526 = vpop.f32.mrf.mxu0
  %527 = vmatprep.mubr.f32.mxu0 0.0
  %528 = vmatmul.mubr.f32.gmra.mxu0 %v422
  %v529 = vpop.f32.mrf.mxu0
  %v530 = vadd.f32 %v411, %v529
  %v531 = vpop.f32.mrf.mxu0
  %532 = vmatprep.mubr.f32.mxu0 0.0
  %533 = vmatmul.mubr.f32.gmra.mxu0 %v425
  %v534 = vpop.f32.mrf.mxu0
  %v535 = vadd.f32 %v411, %v534
  %v536 = vpop.f32.mrf.mxu0
  %537 = vmatprep.mubr.f32.mxu0 0.0
  %538 = vmatmul.mubr.f32.gmra.mxu0 %v428
  %v539 = vpop.f32.mrf.mxu0
  %v540 = vadd.f32 %v411, %v539
  %v541 = vpop.f32.mrf.mxu0
  %542 = vmatprep.mubr.f32.mxu0 0.0
  %543 = vmatmul.mubr.f32.gmra.mxu0 %v431
  %v544 = vpop.f32.mrf.mxu0
  %v545 = vadd.f32 %v411, %v544
  %v546 = vpop.f32.mrf.mxu0
  %547 = vmatprep.mubr.f32.mxu0 0.0
  %548 = vmatmul.mubr.f32.gmra.mxu0 %v434
  %v549 = vpop.f32.mrf.mxu0
  %v550 = vadd.f32 %v411, %v549
  %v551 = vpop.f32.mrf.mxu0
  %552 = vmatprep.mubr.f32.mxu0 0.0
  %553 = vmatmul.mubr.f32.gmra.mxu0 %v437
  %v554 = vpop.f32.mrf.mxu0
  %v555 = vadd.f32 %v411, %v554
  %v556 = vpop.f32.mrf.mxu0
  %557 = vmatprep.mubr.f32.mxu0 0.0
  %558 = vmatmul.mubr.f32.gmra.mxu0 %v440
  %v559 = vpop.f32.mrf.mxu0
  %v560 = vadd.f32 %v411, %v559
  %v561 = vpop.f32.mrf.mxu0
  %562 = vmatprep.mubr.f32.mxu0 0.0
  %563 = vmatmul.mubr.f32.gmra.mxu0 %v443
  %v564 = vpop.f32.mrf.mxu0
  %v565 = vadd.f32 %v411, %v564
  %v566 = vpop.f32.mrf.mxu0
  %567 = vmatprep.mubr.f32.mxu0 0.0
  %568 = vmatmul.mubr.f32.gmra.mxu0 %v446
  %v569 = vpop.f32.mrf.mxu0
  %v570 = vadd.f32 %v411, %v569
  %v571 = vpop.f32.mrf.mxu0
  %572 = vdwg.mxu0
  %v573 = vmax.f32 %v515, 0.0
  %v574 = vmax.f32 %v520, 0.0
  %v575 = vmax.f32 %v525, 0.0
  %v576 = vmax.f32 %v530, 0.0
  %v577 = vmax.f32 %v535, 0.0
  %v578 = vmax.f32 %v540, 0.0
  %v579 = vmax.f32 %v545, 0.0
  %v580 = vmax.f32 %v550, 0.0
  %v581 = vmax.f32 %v555, 0.0
  %v582 = vmax.f32 %v560, 0.0
  %v583 = vmax.f32 %v565, 0.0
  %v584 = vmax.f32 %v570, 0.0
  %v585 = vld [vmem:[%s3] sm:$0xff]
  %v586 = vld [vmem:[%s3 + $0x8] sm:$0xff]
  %v587 = vld [vmem:[%s3 + $0x10] sm:$0xff]
  %v588 = vld [vmem:[%s3 + $0x18] sm:$0xff]
  %v589 = vld [vmem:[%s3 + $0x20] sm:$0xff]
  %v590 = vld [vmem:[%s3 + $0x28] sm:$0xff]
  %v591 = vld [vmem:[%s3 + $0x30] sm:$0xff]
  %v592 = vld [vmem:[%s3 + $0x38] sm:$0xff]
  %v593 = vld [vmem:[%s3 + $0x40] sm:$0xff]
  %v594 = vld [vmem:[%s3 + $0x48] sm:$0xff]
  %v595 = vld [vmem:[%s3 + $0x50] sm:$0xff]
  %v596 = vld [vmem:[%s3 + $0x58] sm:$0xff]
  %v597 = vld [vmem:[%s3 + $0x60] sm:$0xff]
  %v598 = vld [vmem:[%s3 + $0x68] sm:$0xff]
  %v599 = vld [vmem:[%s3 + $0x70] sm:$0xff]
  %v600 = vld [vmem:[%s3 + $0x78] sm:$0xff]
  %v601 = vlaneseq
  %v602 = vshrl.u32 %v601, 7
  %v603 = vsub.s32 2, %v602
  %v604 = vrot.slane %v32, %v603
  %605 = vmatprep.subr.mxu0 0.0
  %606 = vmatpush1.msra.mxu0 %v600
  %607 = vmatprep.subr.mxu0 0.0
  %608 = vmatpush1.msra.mxu0 %v599
  %609 = vmatprep.subr.mxu0 0.0
  %610 = vmatpush1.msra.mxu0 %v598
  %611 = vmatprep.subr.mxu0 0.0
  %612 = vmatpush1.msra.mxu0 %v597
  %613 = vmatprep.subr.mxu0 0.0
  %614 = vmatpush1.msra.mxu0 %v596
  %615 = vmatprep.subr.mxu0 0.0
  %616 = vmatpush1.msra.mxu0 %v595
  %617 = vmatprep.subr.mxu0 0.0
  %618 = vmatpush1.msra.mxu0 %v594
  %619 = vmatprep.subr.mxu0 0.0
  %620 = vmatpush1.msra.mxu0 %v593
  %621 = vmatprep.subr.mxu0 0.0
  %622 = vmatpush1.msra.mxu0 %v592
  %623 = vmatprep.subr.mxu0 0.0
  %624 = vmatpush1.msra.mxu0 %v591
  %625 = vmatprep.subr.mxu0 0.0
  %626 = vmatpush1.msra.mxu0 %v590
  %627 = vmatprep.subr.mxu0 0.0
  %628 = vmatpush1.msra.mxu0 %v589
  %629 = vmatprep.subr.mxu0 0.0
  %630 = vmatpush1.msra.mxu0 %v588
  %631 = vmatprep.subr.mxu0 0.0
  %632 = vmatpush1.msra.mxu0 %v587
  %633 = vmatprep.subr.mxu0 0.0
  %634 = vmatpush1.msra.mxu0 %v586
  %635 = vmatprep.subr.mxu0 0.0
  %636 = vmatpush1.msra.mxu0 %v585
  %637 = vmatprep.subr.mxu0 0.0
  %638 = vmatpush2.msra.mxu0 0.0
  %639 = vmatprep.subr.mxu0 0.0
  %640 = vmatpush2.msra.mxu0 0.0
  %641 = vmatprep.subr.mxu0 0.0
  %642 = vmatpush2.msra.mxu0 0.0
  %643 = vmatprep.subr.mxu0 0.0
  %644 = vmatpush2.msra.mxu0 0.0
  %645 = vmatprep.subr.mxu0 0.0
  %646 = vmatpush2.msra.mxu0 0.0
  %647 = vmatprep.subr.mxu0 0.0
  %648 = vmatpush2.msra.mxu0 0.0
  %649 = vmatprep.subr.mxu0 0.0
  %650 = vmatpush2.msra.mxu0 0.0
  %651 = vmatprep.subr.mxu0 0.0
  %652 = vmatpush2.msra.mxu0 0.0
  %653 = vmatprep.subr.mxu0 0.0
  %654 = vmatpush2.msra.mxu0 0.0
  %655 = vmatprep.subr.mxu0 0.0
  %656 = vmatpush2.msra.mxu0 0.0
  %657 = vmatprep.subr.mxu0 0.0
  %658 = vmatpush2.msra.mxu0 0.0
  %659 = vmatprep.subr.mxu0 0.0
  %660 = vmatpush2.msra.mxu0 0.0
  %661 = vmatprep.subr.mxu0 0.0
  %662 = vmatpush2.msra.mxu0 0.0
  %663 = vmatprep.subr.mxu0 0.0
  %664 = vmatpush2.msra.mxu0 0.0
  %665 = vmatprep.subr.mxu0 0.0
  %666 = vmatpush2.msra.mxu0 0.0
  %667 = vmatprep.subr.mxu0 0.0
  %668 = vmatpush2.msra.mxu0 0.0
  %669 = vmatprep.mubr.f32.mxu0 0.0
  %670 = vmatmul.mubr.f32.gmra.mxu0 %v573
  %v671 = vpop.f32.mrf.mxu0
  %v672 = vadd.f32 %v604, %v671
  %v673 = vpop.f32.mrf.mxu0
  %674 = vmatprep.mubr.f32.mxu0 0.0
  %675 = vmatmul.mubr.f32.gmra.mxu0 %v574
  %v676 = vpop.f32.mrf.mxu0
  %v677 = vadd.f32 %v604, %v676
  %v678 = vpop.f32.mrf.mxu0
  %679 = vmatprep.mubr.f32.mxu0 0.0
  %680 = vmatmul.mubr.f32.gmra.mxu0 %v575
  %v681 = vpop.f32.mrf.mxu0
  %v682 = vadd.f32 %v604, %v681
  %v683 = vpop.f32.mrf.mxu0
  %684 = vmatprep.mubr.f32.mxu0 0.0
  %685 = vmatmul.mubr.f32.gmra.mxu0 %v576
  %v686 = vpop.f32.mrf.mxu0
  %v687 = vadd.f32 %v604, %v686
  %v688 = vpop.f32.mrf.mxu0
  %689 = vmatprep.mubr.f32.mxu0 0.0
  %690 = vmatmul.mubr.f32.gmra.mxu0 %v577
  %v691 = vpop.f32.mrf.mxu0
  %v692 = vadd.f32 %v604, %v691
  %v693 = vpop.f32.mrf.mxu0
  %694 = vmatprep.mubr.f32.mxu0 0.0
  %695 = vmatmul.mubr.f32.gmra.mxu0 %v578
  %v696 = vpop.f32.mrf.mxu0
  %v697 = vadd.f32 %v604, %v696
  %v698 = vpop.f32.mrf.mxu0
  %699 = vmatprep.mubr.f32.mxu0 0.0
  %700 = vmatmul.mubr.f32.gmra.mxu0 %v579
  %v701 = vpop.f32.mrf.mxu0
  %v702 = vadd.f32 %v604, %v701
  %v703 = vpop.f32.mrf.mxu0
  %704 = vmatprep.mubr.f32.mxu0 0.0
  %705 = vmatmul.mubr.f32.gmra.mxu0 %v580
  %v706 = vpop.f32.mrf.mxu0
  %v707 = vadd.f32 %v604, %v706
  %v708 = vpop.f32.mrf.mxu0
  %709 = vmatprep.mubr.f32.mxu0 0.0
  %710 = vmatmul.mubr.f32.gmra.mxu0 %v581
  %v711 = vpop.f32.mrf.mxu0
  %v712 = vadd.f32 %v604, %v711
  %v713 = vpop.f32.mrf.mxu0
  %714 = vmatprep.mubr.f32.mxu0 0.0
  %715 = vmatmul.mubr.f32.gmra.mxu0 %v582
  %v716 = vpop.f32.mrf.mxu0
  %v717 = vadd.f32 %v604, %v716
  %v718 = vpop.f32.mrf.mxu0
  %719 = vmatprep.mubr.f32.mxu0 0.0
  %720 = vmatmul.mubr.f32.gmra.mxu0 %v583
  %v721 = vpop.f32.mrf.mxu0
  %v722 = vadd.f32 %v604, %v721
  %v723 = vpop.f32.mrf.mxu0
  %724 = vmatprep.mubr.f32.mxu0 0.0
  %725 = vmatmul.mubr.f32.gmra.mxu0 %v584
  %v726 = vpop.f32.mrf.mxu0
  %v727 = vadd.f32 %v604, %v726
  %v728 = vpop.f32.mrf.mxu0
  %729 = vdwg.mxu0
  %v730 = vadd.f32 %v392, %v672
  %v731 = vadd.f32 %v393, %v677
  %v732 = vadd.f32 %v394, %v682
  %v733 = vadd.f32 %v395, %v687
  %v734 = vadd.f32 %v396, %v692
  %v735 = vadd.f32 %v397, %v697
  %v736 = vadd.f32 %v398, %v702
  %v737 = vadd.f32 %v399, %v707
  %v738 = vadd.f32 %v400, %v712
  %v739 = vadd.f32 %v401, %v717
  %v740 = vadd.f32 %v402, %v722
  %v741 = vadd.f32 %v403, %v727
  %v742 = vsel %vm41, %v730, 0.0
  %743 = vadd.xlane.f32.xlu0 %v742
  %v744 = vpop.xlane.xlu0 %743
  %v745 = vsel %vm41, %v731, 0.0
  %746 = vadd.xlane.f32.xlu0 %v745
  %v747 = vpop.xlane.xlu0 %746
  %v748 = vsel %vm41, %v732, 0.0
  %749 = vadd.xlane.f32.xlu0 %v748
  %v750 = vpop.xlane.xlu0 %749
  %v751 = vsel %vm41, %v733, 0.0
  %752 = vadd.xlane.f32.xlu0 %v751
  %v753 = vpop.xlane.xlu0 %752
  %v754 = vsel %vm41, %v734, 0.0
  %755 = vadd.xlane.f32.xlu0 %v754
  %v756 = vpop.xlane.xlu0 %755
  %v757 = vsel %vm41, %v735, 0.0
  %758 = vadd.xlane.f32.xlu0 %v757
  %v759 = vpop.xlane.xlu0 %758
  %v760 = vsel %vm41, %v736, 0.0
  %761 = vadd.xlane.f32.xlu0 %v760
  %v762 = vpop.xlane.xlu0 %761
  %v763 = vsel %vm41, %v737, 0.0
  %764 = vadd.xlane.f32.xlu0 %v763
  %v765 = vpop.xlane.xlu0 %764
  %v766 = vsel %vm41, %v738, 0.0
  %767 = vadd.xlane.f32.xlu0 %v766
  %v768 = vpop.xlane.xlu0 %767
  %v769 = vsel %vm41, %v739, 0.0
  %770 = vadd.xlane.f32.xlu0 %v769
  %v771 = vpop.xlane.xlu0 %770
  %v772 = vsel %vm41, %v740, 0.0
  %773 = vadd.xlane.f32.xlu0 %v772
  %v774 = vpop.xlane.xlu0 %773
  %v775 = vsel %vm41, %v741, 0.0
  %776 = vadd.xlane.f32.xlu0 %v775
  %v777 = vpop.xlane.xlu0 %776
  %v778 = vmul.f32 %v744, %v251
  %v779 = vmul.f32 %v747, %v251
  %v780 = vmul.f32 %v750, %v251
  %v781 = vmul.f32 %v753, %v251
  %v782 = vmul.f32 %v756, %v251
  %v783 = vmul.f32 %v759, %v251
  %v784 = vmul.f32 %v762, %v251
  %v785 = vmul.f32 %v765, %v251
  %v786 = vmul.f32 %v768, %v251
  %v787 = vmul.f32 %v771, %v251
  %v788 = vmul.f32 %v774, %v251
  %v789 = vmul.f32 %v777, %v251
  %v790 = vsub.f32 %v730, %v778
  %v791 = vsub.f32 %v731, %v779
  %v792 = vsub.f32 %v732, %v780
  %v793 = vsub.f32 %v733, %v781
  %v794 = vsub.f32 %v734, %v782
  %v795 = vsub.f32 %v735, %v783
  %v796 = vsub.f32 %v736, %v784
  %v797 = vsub.f32 %v737, %v785
  %v798 = vsub.f32 %v738, %v786
  %v799 = vsub.f32 %v739, %v787
  %v800 = vsub.f32 %v740, %v788
  %v801 = vsub.f32 %v741, %v789
  %v802 = vmul.f32 %v790, %v790
  %v803 = vmul.f32 %v791, %v791
  %v804 = vmul.f32 %v792, %v792
  %v805 = vmul.f32 %v793, %v793
  %v806 = vmul.f32 %v794, %v794
  %v807 = vmul.f32 %v795, %v795
  %v808 = vmul.f32 %v796, %v796
  %v809 = vmul.f32 %v797, %v797
  %v810 = vmul.f32 %v798, %v798
  %v811 = vmul.f32 %v799, %v799
  %v812 = vmul.f32 %v800, %v800
  %v813 = vmul.f32 %v801, %v801
  %v814 = vsel %vm41, %v802, 0.0
  %815 = vadd.xlane.f32.xlu0 %v814
  %v816 = vpop.xlane.xlu0 %815
  %v817 = vsel %vm41, %v803, 0.0
  %818 = vadd.xlane.f32.xlu0 %v817
  %v819 = vpop.xlane.xlu0 %818
  %v820 = vsel %vm41, %v804, 0.0
  %821 = vadd.xlane.f32.xlu0 %v820
  %v822 = vpop.xlane.xlu0 %821
  %v823 = vsel %vm41, %v805, 0.0
  %824 = vadd.xlane.f32.xlu0 %v823
  %v825 = vpop.xlane.xlu0 %824
  %v826 = vsel %vm41, %v806, 0.0
  %827 = vadd.xlane.f32.xlu0 %v826
  %v828 = vpop.xlane.xlu0 %827
  %v829 = vsel %vm41, %v807, 0.0
  %830 = vadd.xlane.f32.xlu0 %v829
  %v831 = vpop.xlane.xlu0 %830
  %v832 = vsel %vm41, %v808, 0.0
  %833 = vadd.xlane.f32.xlu0 %v832
  %v834 = vpop.xlane.xlu0 %833
  %v835 = vsel %vm41, %v809, 0.0
  %836 = vadd.xlane.f32.xlu0 %v835
  %v837 = vpop.xlane.xlu0 %836
  %v838 = vsel %vm41, %v810, 0.0
  %839 = vadd.xlane.f32.xlu0 %v838
  %v840 = vpop.xlane.xlu0 %839
  %v841 = vsel %vm41, %v811, 0.0
  %842 = vadd.xlane.f32.xlu0 %v841
  %v843 = vpop.xlane.xlu0 %842
  %v844 = vsel %vm41, %v812, 0.0
  %845 = vadd.xlane.f32.xlu0 %v844
  %v846 = vpop.xlane.xlu0 %845
  %v847 = vsel %vm41, %v813, 0.0
  %848 = vadd.xlane.f32.xlu0 %v847
  %v849 = vpop.xlane.xlu0 %848
  %v850 = vmul.f32 %v816, %v251
  %v851 = vmul.f32 %v819, %v251
  %v852 = vmul.f32 %v822, %v251
  %v853 = vmul.f32 %v825, %v251
  %v854 = vmul.f32 %v828, %v251
  %v855 = vmul.f32 %v831, %v251
  %v856 = vmul.f32 %v834, %v251
  %v857 = vmul.f32 %v837, %v251
  %v858 = vmul.f32 %v840, %v251
  %v859 = vmul.f32 %v843, %v251
  %v860 = vmul.f32 %v846, %v251
  %v861 = vmul.f32 %v849, %v251
  %v862 = vadd.f32 %v850, 1e-05
  %v863 = vadd.f32 %v851, 1e-05
  %v864 = vadd.f32 %v852, 1e-05
  %v865 = vadd.f32 %v853, 1e-05
  %v866 = vadd.f32 %v854, 1e-05
  %v867 = vadd.f32 %v855, 1e-05
  %v868 = vadd.f32 %v856, 1e-05
  %v869 = vadd.f32 %v857, 1e-05
  %v870 = vadd.f32 %v858, 1e-05
  %v871 = vadd.f32 %v859, 1e-05
  %v872 = vadd.f32 %v860, 1e-05
  %v873 = vadd.f32 %v861, 1e-05
  %v874 = vrsqrt.pop %v862
  %v875 = vrsqrt.pop %v863
  %v876 = vrsqrt.pop %v864
  %v877 = vrsqrt.pop %v865
  %v878 = vrsqrt.pop %v866
  %v879 = vrsqrt.pop %v867
  %v880 = vrsqrt.pop %v868
  %v881 = vrsqrt.pop %v869
  %v882 = vrsqrt.pop %v870
  %v883 = vrsqrt.pop %v871
  %v884 = vrsqrt.pop %v872
  %v885 = vrsqrt.pop %v873
  %v886 = vmul.f32 %v790, %v874
  %v887 = vmul.f32 %v791, %v875
  %v888 = vmul.f32 %v792, %v876
  %v889 = vmul.f32 %v793, %v877
  %v890 = vmul.f32 %v794, %v878
  %v891 = vmul.f32 %v795, %v879
  %v892 = vmul.f32 %v796, %v880
  %v893 = vmul.f32 %v797, %v881
  %v894 = vmul.f32 %v798, %v882
  %v895 = vmul.f32 %v799, %v883
  %v896 = vmul.f32 %v800, %v884
  %v897 = vmul.f32 %v801, %v885
  %v898 = vlaneseq
  %v899 = vshrl.u32 %v898, 7
  %v900 = vsub.s32 5, %v899
  %v901 = vrot.slane %v32, %v900
  %v902 = vmul.f32 %v886, %v901
  %v903 = vmul.f32 %v887, %v901
  %v904 = vmul.f32 %v888, %v901
  %v905 = vmul.f32 %v889, %v901
  %v906 = vmul.f32 %v890, %v901
  %v907 = vmul.f32 %v891, %v901
  %v908 = vmul.f32 %v892, %v901
  %v909 = vmul.f32 %v893, %v901
  %v910 = vmul.f32 %v894, %v901
  %v911 = vmul.f32 %v895, %v901
  %v912 = vmul.f32 %v896, %v901
  %v913 = vmul.f32 %v897, %v901
  %v914 = vlaneseq
  %v915 = vshrl.u32 %v914, 7
  %v916 = vsub.s32 6, %v915
  %v917 = vrot.slane %v32, %v916
  %v918 = vadd.f32 %v902, %v917
  %v919 = vadd.f32 %v903, %v917
  %v920 = vadd.f32 %v904, %v917
  %v921 = vadd.f32 %v905, %v917
  %v922 = vadd.f32 %v906, %v917
  %v923 = vadd.f32 %v907, %v917
  %v924 = vadd.f32 %v908, %v917
  %v925 = vadd.f32 %v909, %v917
  %v926 = vadd.f32 %v910, %v917
  %v927 = vadd.f32 %v911, %v917
  %v928 = vadd.f32 %v912, %v917
  %v929 = vadd.f32 %v913, %v917
  %930 = vst.msk [vmem:[%s5] sm:$0xff] %vm41, %v918
  %931 = vst.msk [vmem:[%s5 + $0x8] sm:$0xff] %vm41, %v919
  %932 = vst.msk [vmem:[%s5 + $0x10] sm:$0xff] %vm41, %v920
  %933 = vst.msk [vmem:[%s5 + $0x18] sm:$0xff] %vm41, %v921
  %934 = vst.msk [vmem:[%s5 + $0x20] sm:$0xff] %vm41, %v922
  %935 = vst.msk [vmem:[%s5 + $0x28] sm:$0xff] %vm41, %v923
  %936 = vst.msk [vmem:[%s5 + $0x30] sm:$0xff] %vm41, %v924
  %937 = vst.msk [vmem:[%s5 + $0x38] sm:$0xff] %vm41, %v925
  %938 = vst.msk [vmem:[%s5 + $0x40] sm:$0xff] %vm41, %v926
  %939 = vst.msk [vmem:[%s5 + $0x48] sm:$0xff] %vm41, %v927
  %940 = vst.msk [vmem:[%s5 + $0x50] sm:$0xff] %vm41, %v928
  %941 = vst.msk [vmem:[%s5 + $0x58] sm:$0xff] %vm41, %v929
  // Predicated region
  $region22: #{tpu_custom_call.1} parent=0 // pred_check
    _
  $region23: #{tpu_custom_call.1} parent=0 // pred_check_branch
    %943 = sbr.rel (0) target = $region25
  $region24: #{tpu_custom_call.1} parent=0 // pred_region
    _
  $region25: #{tpu_custom_call.1} parent=0 // pred_fallthru
    _
  // Predicated region
  $region26: #{tpu_custom_call.1} parent=0 // pred_check
    _
  $region27: #{tpu_custom_call.1} parent=0 // pred_check_branch
    %945 = sbr.rel (0) target = $region29
  $region28: #{tpu_custom_call.1} parent=0 // pred_region
    _
  $region29: #{tpu_custom_call.1} parent=0 // pred_fallthru
    _

</llo_original>
